<compile_context>
chip_gen: v6e
topology: v6e:2x2x1
jax: 0.10.0
libtpu: 0.0.40
codegen_flags: <defaults>
</compile_context>

<pallas_src>
import jax
import jax.numpy as jnp
from jax.experimental import pallas as pl
from jax.experimental.pallas import tpu as pltpu

# ---- surrogate model hyper-parameters ---------------------------------------
EMB_DIM = 16          # per-species embedding width
N_RBF = 32            # radial basis functions
HIDDEN = 32           # pair-MLP hidden width
CUTOFF = 5.0          # two_body_cutoff
RBF_GAMMA = 4.0
# stress_weight default = MetalUnits.pressure * 1e4 ~= ase.units.GPa
STRESS_WEIGHT = 1.0 / 160.21766208

LANES = 128

# packed per-atom input block column layout ([N_pad, 128])
COL_POS = 0           # 0:3   xyz position
COL_BID = 3           # 3     batch id (float; exact for ids < 2^24)
COL_ONE = 4           # 4     constant 1.0  (row-sum trick)
ACC_E = 5             # 5     (zero in inputs) -> energy accumulator column
COL_EMB = 8           # 8:8+EMB_DIM  species embedding

# packed coefficient block column layout ([N_RBF, 128])
CF_MU = 0             # col 0: rbf centers
CF_B1 = 1             # col 1: b1
CF_W2 = 2             # col 2: w2 readout vector

# packed per-atom output slab column layout ([N_pad, 128])
OUT_F = 0             # 0:3   forces
OUT_E = 3             # 3     per-atom energy
OUT_V = 4             # 4:13  pos (x) force  (virial contribution)


def _round_up(x, m):
    return ((x + m - 1) // m) * m


def _choose_tiles(n):
    """Adaptive pair-tile sizes (powers of two in [8, 128]).

    TILE_J is the lane dim of every [TI, TJ] intermediate -> push it to 128.
    TILE_I keeps >=2 row tiles when possible so megacore can shard the
    "parallel" i axis.  128x128 tiles keep the ~20-30 MiB of 3-D f32
    intermediates within a 48 MiB VMEM budget (fits v7x's 64 MiB physical).
    """
    n = max(int(n), 8)
    tj = 8
    while tj < 128 and tj < n:
        tj *= 2
    n_pad = _round_up(n, tj)
    max_ti = n_pad if n_pad < 16 else n_pad // 2      # keep >= 2 i tiles
    ti = 8
    while ti * 2 <= min(128, max_ti):
        ti *= 2
    return ti, tj, n_pad


def _pair_tile_kernel(ibmin_ref, ibmax_ref, jbmin_ref, jbmax_ref,
                      atom_i_ref, atom_j_ref, w1t_ref, coef_ref,
                      out_ref, acc_ref):
    f32 = jnp.float32
    ti = atom_i_ref.shape[0]
    tj = atom_j_ref.shape[0]
    i_step = pl.program_id(0)
    j_step = pl.program_id(1)
    nj = pl.num_programs(1)

    @pl.when(j_step == 0)
    def _init():
        acc_ref[...] = jnp.zeros_like(acc_ref)

    ai = atom_i_ref[...]                                  # [TI, 128]
    pos_i = ai[:, COL_POS:COL_POS + 3]                    # [TI, 3]

    # batch-aware tile pruning: skip all pair work when the batch-id ranges of
    # the two tiles cannot overlap (the in-tile mask would zero everything).
    overlap = jnp.logical_and(ibmin_ref[i_step] <= jbmax_ref[j_step],
                              jbmin_ref[j_step] <= ibmax_ref[i_step])

    @pl.when(overlap)
    def _compute():
        aj = atom_j_ref[...]                              # [TJ, 128]
        pos_j = aj[:, COL_POS:COL_POS + 3]                # [TJ, 3]

        # ---- pairwise distances from direct coordinate differences ---------
        dx = pos_i[:, 0:1] - pos_j[:, 0:1].T              # [TI, TJ]
        dy = pos_i[:, 1:2] - pos_j[:, 1:2].T
        dz = pos_i[:, 2:3] - pos_j[:, 2:3].T
        r2 = dx * dx + dy * dy + dz * dz

        gi = jax.lax.broadcasted_iota(jnp.int32, (ti, tj), 0) + i_step * ti
        gj = jax.lax.broadcasted_iota(jnp.int32, (ti, tj), 1) + j_step * tj
        is_self = gi == gj
        eye = is_self.astype(f32)

        # +eye keeps the diagonal safe; +1e-12 guards coincident atoms
        r = jnp.sqrt(r2 + eye + 1e-12)

        # same-batch mask: plain VPU compare of batch ids (no one-hot matmul)
        same_batch = ai[:, COL_BID:COL_BID + 1] == aj[:, COL_BID:COL_BID + 1].T
        mask = (same_batch & jnp.logical_not(is_self) & (r < CUTOFF)).astype(f32)

        # pair species scale from element embeddings (MXU, contracts EMB_DIM)
        emb_i = ai[:, COL_EMB:COL_EMB + EMB_DIM]
        emb_j = aj[:, COL_EMB:COL_EMB + EMB_DIM]
        s = jax.lax.dot_general(emb_i, emb_j, (((1,), (1,)), ((), ())),
                                preferred_element_type=f32)     # [TI, TJ]

        # ---- radial basis + pair MLP, lane-dense [TI, K/H, TJ] layout -------
        mu3 = coef_ref[:, CF_MU:CF_MU + 1].reshape(1, N_RBF, 1)
        b1_3 = coef_ref[0:HIDDEN, CF_B1:CF_B1 + 1].reshape(1, HIDDEN, 1)
        w2_3 = coef_ref[0:HIDDEN, CF_W2:CF_W2 + 1].reshape(1, HIDDEN, 1)

        d3 = r[:, None, :] - mu3                           # [TI, K, TJ]
        rbf3 = jnp.exp(-RBF_GAMMA * d3 * d3)               # lane-dense exp
        drbf3 = (-2.0 * RBF_GAMMA) * d3 * rbf3

        # K -> HIDDEN contraction: two batched bf16 MXU matmuls (no concat)
        w1t_b = jnp.broadcast_to(w1t_ref[...][None, :, :], (ti, HIDDEN, N_RBF))
        pre3 = jnp.einsum('ahk,akb->ahb', w1t_b, rbf3.astype(jnp.bfloat16),
                          preferred_element_type=f32) + b1_3     # [TI, H, TJ]
        dpre3 = jnp.einsum('ahk,akb->ahb', w1t_b, drbf3.astype(jnp.bfloat16),
                           preferred_element_type=f32)           # [TI, H, TJ]

        h3 = jnp.tanh(pre3)                                # lane-dense tanh
        g = jnp.sum(h3 * w2_3, axis=1)                     # [TI, TJ] (XLU)
        dg = jnp.sum((1.0 - h3 * h3) * dpre3 * w2_3, axis=1)

        # smooth cosine cutoff (exact derivative via sin)
        theta = (jnp.pi / CUTOFF) * r
        fc = 0.5 * (jnp.cos(theta) + 1.0)
        dfc = (-0.5 * jnp.pi / CUTOFF) * jnp.sin(theta)

        sm = mask * s
        e_pair = sm * fc * g                               # [TI, TJ]
        de_dr = sm * (dfc * g + fc * dg)                   # [TI, TJ]
        inv_r = pl.reciprocal(r, approx=True)
        c = de_dr * inv_r

        # ---- accumulate: one K=TJ dense matmul + one XLU lane reduce --------
        # cols 0:3 -> sum_j c_ij * pos_j,  col 4 -> sum_j c_ij (ones column),
        # col 5 (zero in aj) -> sum_j e_pair_ij added explicitly below.
        acc_ref[...] += jnp.dot(c, aj, preferred_element_type=f32)
        acc_ref[:, ACC_E:ACC_E + 1] += jnp.sum(e_pair, axis=1, keepdims=True)

    @pl.when(j_step == nj - 1)
    def _finalize():
        cp = acc_ref[:, COL_POS:COL_POS + 3]               # sum_j c * pos_j
        rowsum = acc_ref[:, COL_ONE:COL_ONE + 1]           # sum_j c
        forces = cp - rowsum * pos_i                       # [TI, 3]
        atom_e = 0.5 * acc_ref[:, ACC_E:ACC_E + 1]         # [TI, 1]
        outer = (pos_i[:, :, None] * forces[:, None, :]).reshape(ti, 9)
        pad = jnp.zeros((ti, LANES - (OUT_V + 9)), jnp.float32)
        out_ref[...] = jnp.concatenate([forces, atom_e, outer, pad], axis=-1)


def _pack_atoms(positions, bid_pad_f, emb, n_pad):
    n = positions.shape[0]
    blk = jnp.zeros((n_pad, LANES), jnp.float32)
    blk = blk.at[:n, COL_POS:COL_POS + 3].set(positions.astype(jnp.float32))
    blk = blk.at[:, COL_BID].set(bid_pad_f)
    blk = blk.at[:, COL_ONE].set(1.0)
    blk = blk.at[:n, COL_EMB:COL_EMB + EMB_DIM].set(emb)
    return blk


def _pack_coef(params):
    blk = jnp.zeros((N_RBF, LANES), jnp.float32)
    blk = blk.at[:, CF_MU].set(params["mu"])
    blk = blk.at[:HIDDEN, CF_B1].set(params["b1"])
    blk = blk.at[:HIDDEN, CF_W2].set(params["w2"])
    return blk


@jax.jit
def mattersim_forward(positions, cell, atomic_numbers, batch_idx, params):
    """positions [N,3] f32, cell [B,3,3] f32, atomic_numbers [N] i32, batch_idx [N] i32."""
    n = positions.shape[0]
    b = cell.shape[0]
    tile_i, tile_j, n_pad = _choose_tiles(n)

    # padded atoms get unique negative batch ids -> they never pair with anything
    bid_pad = jnp.concatenate([
        batch_idx.astype(jnp.int32),
        -1 - jnp.arange(n_pad - n, dtype=jnp.int32)])

    emb = params["embed"][atomic_numbers]                  # [N, EMB_DIM]
    atom_block = _pack_atoms(positions, bid_pad.astype(jnp.float32), emb, n_pad)
    w1t_bf16 = params["w1"].T.astype(jnp.bfloat16)         # [HIDDEN, N_RBF]
    coef_block = _pack_coef(params)

    # per-tile batch-id ranges for scalar-prefetched tile pruning
    ibmin = bid_pad.reshape(n_pad // tile_i, tile_i).min(axis=1)
    ibmax = bid_pad.reshape(n_pad // tile_i, tile_i).max(axis=1)
    jbmin = bid_pad.reshape(n_pad // tile_j, tile_j).min(axis=1)
    jbmax = bid_pad.reshape(n_pad // tile_j, tile_j).max(axis=1)

    grid = (n_pad // tile_i, n_pad // tile_j)
    slab = pl.pallas_call(
        _pair_tile_kernel,
        out_shape=jax.ShapeDtypeStruct((n_pad, LANES), jnp.float32),
        grid_spec=pltpu.PrefetchScalarGridSpec(
            num_scalar_prefetch=4,
            grid=grid,
            in_specs=[
                pl.BlockSpec((tile_i, LANES), lambda i, j, *_: (i, 0)),   # atom rows (i)
                pl.BlockSpec((tile_j, LANES), lambda i, j, *_: (j, 0)),   # atom cols (j)
                pl.BlockSpec((HIDDEN, N_RBF), lambda i, j, *_: (0, 0)),   # w1^T (bf16)
                pl.BlockSpec((N_RBF, LANES), lambda i, j, *_: (0, 0)),    # mu/b1/w2
            ],
            out_specs=pl.BlockSpec((tile_i, LANES), lambda i, j, *_: (i, 0)),
            scratch_shapes=[pltpu.VMEM((tile_i, LANES), jnp.float32)],
        ),
        compiler_params=pltpu.CompilerParams(
            dimension_semantics=("parallel", "arbitrary"),
            vmem_limit_bytes=48 * 1024 * 1024),
    )(ibmin, ibmax, jbmin, jbmax, atom_block, atom_block, w1t_bf16, coef_block)

    slab = slab[:n]
    forces = slab[:, OUT_F:OUT_F + 3]                      # [N, 3]
    atom_e = slab[:, OUT_E]                                # [N]
    virial_per_atom = slab[:, OUT_V:OUT_V + 9]             # [N, 9]

    # tiny O(N) per-batch reductions stay in XLA
    energy = jax.ops.segment_sum(atom_e, batch_idx, num_segments=b)       # [B]
    virial = -jax.ops.segment_sum(virial_per_atom, batch_idx, num_segments=b)
    vol = jnp.abs(jnp.linalg.det(cell))                                   # [B]
    stress = (STRESS_WEIGHT * virial / vol[:, None]).reshape(b, 3, 3)

    return {"energy": energy, "forces": forces, "stress": stress}


def init_params(key):
    k_emb, k_w1, k_w2 = jax.random.split(key, 3)
    return {
        "embed": 0.1 * jax.random.normal(k_emb, (95, EMB_DIM), jnp.float32),
        "mu": jnp.linspace(0.0, CUTOFF, N_RBF, dtype=jnp.float32),
        "w1": 0.3 * jax.random.normal(k_w1, (N_RBF, HIDDEN), jnp.float32),
        "b1": jnp.zeros((HIDDEN,), jnp.float32),
        "w2": 0.3 * jax.random.normal(k_w2, (HIDDEN,), jnp.float32),
    }


if __name__ == "__main__":
    N_ATOMS = 16
    N_BATCH = 2

    key = jax.random.PRNGKey(0)
    k_pos, k_z, k_par = jax.random.split(key, 3)

    positions = 6.0 * jax.random.uniform(k_pos, (N_ATOMS, 3), jnp.float32)
    atomic_numbers = jax.random.randint(k_z, (N_ATOMS,), 1, 95, dtype=jnp.int32)
    batch_idx = jnp.array([0] * (N_ATOMS // 2) + [1] * (N_ATOMS // 2), jnp.int32)
    cell = jnp.stack([6.0 * jnp.eye(3, dtype=jnp.float32)] * N_BATCH)

    params = init_params(k_par)

    out = mattersim_forward(positions, cell, atomic_numbers, batch_idx, params)
    jax.block_until_ready(out)

    assert out["energy"].shape == (N_BATCH,)
    assert out["forces"].shape == (N_ATOMS, 3)
    assert out["stress"].shape == (N_BATCH, 3, 3)
    assert bool(jnp.all(jnp.isfinite(out["energy"])))
    assert bool(jnp.all(jnp.isfinite(out["forces"])))
    assert bool(jnp.all(jnp.isfinite(out["stress"])))
    print("KERNEL_OK")
</pallas_src>

<mosaic_0001>
module attributes {stable_mosaic.version = 11 : i64} {
  func.func private @main(%arg0: i32) attributes {dimension_semantics = [#tpu.dimension_semantics<core_parallel>], iteration_bounds = array<i64: 2>, tpu.core_type = #tpu.core_type<sc_scalar_subcore>, window_params = []} {
    return
  }
}

module attributes {stable_mosaic.version = 11 : i64} {
  func.func private @main(%arg0: i32) attributes {dimension_semantics = [#tpu.dimension_semantics<core_parallel>], iteration_bounds = array<i64: 2>, tpu.core_type = #tpu.core_type<sc_scalar_subcore>, window_params = []} {
    return
  }
}

module attributes {stable_mosaic.version = 11 : i64} {
  func.func @_pair_tile_kernel(%arg0: i32, %arg1: i32, %arg2: memref<2xi32, #tpu.memory_space<smem>>, %arg3: memref<2xi32, #tpu.memory_space<smem>>, %arg4: memref<1xi32, #tpu.memory_space<smem>>, %arg5: memref<1xi32, #tpu.memory_space<smem>>, %arg6: memref<8x128xf32, #tpu.memory_space<vmem>>, %arg7: memref<16x128xf32, #tpu.memory_space<vmem>>, %arg8: memref<32x32xbf16, #tpu.memory_space<vmem>>, %arg9: memref<32x128xf32, #tpu.memory_space<vmem>>, %arg10: memref<8x128xf32, #tpu.memory_space<vmem>>, %arg11: memref<8x128xf32, #tpu.memory_space<vmem>>) attributes {dimension_semantics = [#tpu.dimension_semantics<parallel>, #tpu.dimension_semantics<arbitrary>], iteration_bounds = array<i64: 2, 1>, scalar_prefetch = 4 : i64, scratch_operands = 1 : i64, tpu.core_type = #tpu.core_type<tc>, window_params = [{transform_indices = @transform_0, window_bounds = array<i64: 8, 128>}, {transform_indices = @transform_1, window_bounds = array<i64: 16, 128>}, {pipeline_mode = #tpu.pipeline_mode<synchronous>, transform_indices = @transform_2, window_bounds = array<i64: 32, 32>}, {pipeline_mode = #tpu.pipeline_mode<synchronous>, transform_indices = @transform_3, window_bounds = array<i64: 32, 128>}, {transform_indices = @transform_4, window_bounds = array<i64: 8, 128>}]} {
    %c0_i32 = arith.constant 0 : i32
    %0 = arith.cmpi eq, %arg1, %c0_i32 : i32
    %1 = arith.extui %0 : i1 to i32
    %c0_i32_0 = arith.constant 0 : i32
    %2 = arith.cmpi ne, %1, %c0_i32_0 : i32
    scf.if %2 {
      %cst = arith.constant 0.000000e+00 : f32
      %21 = vector.broadcast %cst : f32 to vector<8x128xf32>
      %c0_5 = arith.constant 0 : index
      %c0_6 = arith.constant 0 : index
      %22 = vector.load %arg11[%c0_5, %c0_6] : memref<8x128xf32, #tpu.memory_space<vmem>>, vector<8x128xf32>
      tpu.vector_store %arg11[%c0_5, %c0_6], %21 {strides = array<i32>} : memref<8x128xf32, #tpu.memory_space<vmem>>, vector<8x128xf32>,
    } else {
    }
    %c0 = arith.constant 0 : index
    %c0_1 = arith.constant 0 : index
    %3 = vector.load %arg6[%c0, %c0_1] : memref<8x128xf32, #tpu.memory_space<vmem>>, vector<8x128xf32>
    %4 = vector.extract_strided_slice %3 {offsets = [0, 0], sizes = [8, 3], strides = [1, 1]} : vector<8x128xf32> to vector<8x3xf32>
    %5 = arith.index_cast %arg0 : i32 to index
    %6 = memref.load %arg2[%5] : memref<2xi32, #tpu.memory_space<smem>>
    %7 = arith.index_cast %arg1 : i32 to index
    %8 = memref.load %arg5[%7] : memref<1xi32, #tpu.memory_space<smem>>
    %9 = arith.cmpi sle, %6, %8 : i32
    %10 = arith.index_cast %arg1 : i32 to index
    %11 = memref.load %arg4[%10] : memref<1xi32, #tpu.memory_space<smem>>
    %12 = arith.index_cast %arg0 : i32 to index
    %13 = memref.load %arg3[%12] : memref<2xi32, #tpu.memory_space<smem>>
    %14 = arith.cmpi sle, %11, %13 : i32
    %15 = arith.andi %9, %14 : i1
    %16 = arith.extui %15 : i1 to i32
    %c0_i32_2 = arith.constant 0 : i32
    %17 = arith.cmpi ne, %16, %c0_i32_2 : i32
    scf.if %17 {
      %c0_5 = arith.constant 0 : index
      %c0_6 = arith.constant 0 : index
      %21 = vector.load %arg7[%c0_5, %c0_6] : memref<16x128xf32, #tpu.memory_space<vmem>>, vector<16x128xf32>
      %22 = vector.extract_strided_slice %21 {offsets = [0, 0], sizes = [16, 3], strides = [1, 1]} : vector<16x128xf32> to vector<16x3xf32>
      %23 = vector.extract_strided_slice %4 {offsets = [0, 0], sizes = [8, 1], strides = [1, 1]} : vector<8x3xf32> to vector<8x1xf32>
      %24 = vector.extract_strided_slice %22 {offsets = [0, 0], sizes = [16, 1], strides = [1, 1]} : vector<16x3xf32> to vector<16x1xf32>
      %25 = tpu.transpose %24, [1, 0] : vector<16x1xf32> -> vector<1x16xf32>
      %26 = vector.broadcast %23 : vector<8x1xf32> to vector<8x16xf32>
      %27 = vector.broadcast %25 : vector<1x16xf32> to vector<8x16xf32>
      %28 = arith.subf %26, %27 : vector<8x16xf32>
      %29 = vector.extract_strided_slice %4 {offsets = [0, 1], sizes = [8, 1], strides = [1, 1]} : vector<8x3xf32> to vector<8x1xf32>
      %30 = vector.extract_strided_slice %22 {offsets = [0, 1], sizes = [16, 1], strides = [1, 1]} : vector<16x3xf32> to vector<16x1xf32>
      %31 = tpu.transpose %30, [1, 0] : vector<16x1xf32> -> vector<1x16xf32>
      %32 = vector.broadcast %29 : vector<8x1xf32> to vector<8x16xf32>
      %33 = vector.broadcast %31 : vector<1x16xf32> to vector<8x16xf32>
      %34 = arith.subf %32, %33 : vector<8x16xf32>
      %35 = vector.extract_strided_slice %4 {offsets = [0, 2], sizes = [8, 1], strides = [1, 1]} : vector<8x3xf32> to vector<8x1xf32>
      %36 = vector.extract_strided_slice %22 {offsets = [0, 2], sizes = [16, 1], strides = [1, 1]} : vector<16x3xf32> to vector<16x1xf32>
      %37 = tpu.transpose %36, [1, 0] : vector<16x1xf32> -> vector<1x16xf32>
      %38 = vector.broadcast %35 : vector<8x1xf32> to vector<8x16xf32>
      %39 = vector.broadcast %37 : vector<1x16xf32> to vector<8x16xf32>
      %40 = arith.subf %38, %39 : vector<8x16xf32>
      %41 = arith.mulf %28, %28 : vector<8x16xf32>
      %42 = arith.mulf %34, %34 : vector<8x16xf32>
      %43 = arith.addf %41, %42 : vector<8x16xf32>
      %44 = arith.mulf %40, %40 : vector<8x16xf32>
      %45 = arith.addf %43, %44 : vector<8x16xf32>
      %46 = tpu.iota {dimensions = array<i32: 0>} : vector<8x16xi32>
      %c8_i32 = arith.constant 8 : i32
      %47 = arith.muli %arg0, %c8_i32 : i32
      %48 = vector.broadcast %47 : i32 to vector<8x16xi32>
      %49 = arith.addi %46, %48 : vector<8x16xi32>
      %50 = tpu.iota {dimensions = array<i32: 1>} : vector<8x16xi32>
      %c16_i32 = arith.constant 16 : i32
      %51 = arith.muli %arg1, %c16_i32 : i32
      %52 = vector.broadcast %51 : i32 to vector<8x16xi32>
      %53 = arith.addi %50, %52 : vector<8x16xi32>
      %54 = arith.cmpi eq, %49, %53 : vector<8x16xi32>
      %55 = arith.extui %54 : vector<8x16xi1> to vector<8x16xi32>
      %56 = arith.sitofp %55 : vector<8x16xi32> to vector<8x16xf32>
      %57 = arith.addf %45, %56 : vector<8x16xf32>
      %cst = arith.constant 9.99999996E-13 : f32
      %58 = vector.broadcast %cst : f32 to vector<8x16xf32>
      %59 = arith.addf %57, %58 : vector<8x16xf32>
      %60 = math.sqrt %59 : vector<8x16xf32>
      %61 = vector.extract_strided_slice %3 {offsets = [0, 3], sizes = [8, 1], strides = [1, 1]} : vector<8x128xf32> to vector<8x1xf32>
      %62 = vector.extract_strided_slice %21 {offsets = [0, 3], sizes = [16, 1], strides = [1, 1]} : vector<16x128xf32> to vector<16x1xf32>
      %63 = tpu.transpose %62, [1, 0] : vector<16x1xf32> -> vector<1x16xf32>
      %64 = vector.broadcast %61 : vector<8x1xf32> to vector<8x16xf32>
      %65 = vector.broadcast %63 : vector<1x16xf32> to vector<8x16xf32>
      %66 = arith.cmpf oeq, %64, %65 : vector<8x16xf32>
      %cst_7 = arith.constant dense<true> : vector<8x16xi1>
      %67 = arith.xori %54, %cst_7 : vector<8x16xi1>
      %68 = arith.andi %66, %67 : vector<8x16xi1>
      %cst_8 = arith.constant 5.000000e+00 : f32
      %69 = vector.broadcast %cst_8 : f32 to vector<8x16xf32>
      %70 = arith.cmpf olt, %60, %69 : vector<8x16xf32>
      %71 = arith.andi %68, %70 : vector<8x16xi1>
      %72 = arith.extui %71 : vector<8x16xi1> to vector<8x16xi32>
      %73 = arith.sitofp %72 : vector<8x16xi32> to vector<8x16xf32>
      %74 = vector.extract_strided_slice %3 {offsets = [0, 8], sizes = [8, 16], strides = [1, 1]} : vector<8x128xf32> to vector<8x16xf32>
      %75 = vector.extract_strided_slice %21 {offsets = [0, 8], sizes = [16, 16], strides = [1, 1]} : vector<16x128xf32> to vector<16x16xf32>
      %cst_9 = arith.constant dense<0.000000e+00> : vector<8x16xf32>
      %76 = tpu.matmul %74, %75, %cst_9 {dimension_numbers = #tpu.dot_dimension_numbers<[1], [1], [0], [0], [0, 0, 1, 0], [], []>} : vector<8x16xf32>, vector<16x16xf32>, vector<8x16xf32> -> vector<8x16xf32>
      %c0_10 = arith.constant 0 : index
      %c0_11 = arith.constant 0 : index
      %77 = vector.load %arg9[%c0_10, %c0_11] : memref<32x128xf32, #tpu.memory_space<vmem>>, vector<32x1xf32>
      %78 = vector.shape_cast %77 : vector<32x1xf32> to vector<1x32x1xf32>
      %c0_12 = arith.constant 0 : index
      %c1 = arith.constant 1 : index
      %79 = vector.load %arg9[%c0_12, %c1] : memref<32x128xf32, #tpu.memory_space<vmem>>, vector<32x1xf32>
      %80 = vector.shape_cast %79 : vector<32x1xf32> to vector<1x32x1xf32>
      %c0_13 = arith.constant 0 : index
      %c2 = arith.constant 2 : index
      %81 = vector.load %arg9[%c0_13, %c2] : memref<32x128xf32, #tpu.memory_space<vmem>>, vector<32x1xf32>
      %82 = vector.shape_cast %81 : vector<32x1xf32> to vector<1x32x1xf32>
      %83 = vector.shape_cast %60 : vector<8x16xf32> to vector<8x1x16xf32>
      %84 = vector.broadcast %83 : vector<8x1x16xf32> to vector<8x32x16xf32>
      %85 = vector.broadcast %78 : vector<1x32x1xf32> to vector<8x32x16xf32>
      %86 = arith.subf %84, %85 : vector<8x32x16xf32>
      %cst_14 = arith.constant -4.000000e+00 : f32
      %87 = vector.broadcast %cst_14 : f32 to vector<8x32x16xf32>
      %88 = arith.mulf %87, %86 : vector<8x32x16xf32>
      %89 = arith.mulf %88, %86 : vector<8x32x16xf32>
      %90 = math.exp %89 : vector<8x32x16xf32>
      %cst_15 = arith.constant -8.000000e+00 : f32
      %91 = vector.broadcast %cst_15 : f32 to vector<8x32x16xf32>
      %92 = arith.mulf %91, %86 : vector<8x32x16xf32>
      %93 = arith.mulf %92, %90 : vector<8x32x16xf32>
      %c0_16 = arith.constant 0 : index
      %c0_17 = arith.constant 0 : index
      %94 = vector.load %arg8[%c0_16, %c0_17] : memref<32x32xbf16, #tpu.memory_space<vmem>>, vector<32x32xbf16>
      %95 = vector.shape_cast %94 : vector<32x32xbf16> to vector<1x32x32xbf16>
      %96 = vector.shape_cast %95 : vector<1x32x32xbf16> to vector<1x32x32xbf16>
      %97 = vector.broadcast %96 : vector<1x32x32xbf16> to vector<8x32x32xbf16>
      %98 = arith.truncf %90 : vector<8x32x16xf32> to vector<8x32x16xbf16>
      "tpu.trace_start"() <{level = 10 : i32, message = "ahk,akb->ahb"}> : () -> ()
      %cst_18 = arith.constant dense<0.000000e+00> : vector<8x32x16xf32>
      %99 = tpu.matmul %97, %98, %cst_18 {dimension_numbers = #tpu.dot_dimension_numbers<[2], [1], [1], [2], [0, 0, 0, 1, 1, 2], [0], [0]>} : vector<8x32x32xbf16>, vector<8x32x16xbf16>, vector<8x32x16xf32> -> vector<8x32x16xf32>
      "tpu.trace_stop"() : () -> ()
      %100 = vector.broadcast %80 : vector<1x32x1xf32> to vector<8x32x16xf32>
      %101 = arith.addf %99, %100 : vector<8x32x16xf32>
      %102 = arith.truncf %93 : vector<8x32x16xf32> to vector<8x32x16xbf16>
      "tpu.trace_start"() <{level = 10 : i32, message = "ahk,akb->ahb"}> : () -> ()
      %cst_19 = arith.constant dense<0.000000e+00> : vector<8x32x16xf32>
      %103 = tpu.matmul %97, %102, %cst_19 {dimension_numbers = #tpu.dot_dimension_numbers<[2], [1], [1], [2], [0, 0, 0, 1, 1, 2], [0], [0]>} : vector<8x32x32xbf16>, vector<8x32x16xbf16>, vector<8x32x16xf32> -> vector<8x32x16xf32>
      "tpu.trace_stop"() : () -> ()
      %104 = math.tanh %101 : vector<8x32x16xf32>
      %105 = vector.broadcast %82 : vector<1x32x1xf32> to vector<8x32x16xf32>
      %106 = arith.mulf %104, %105 : vector<8x32x16xf32>
      %cst_20 = arith.constant dense<0.000000e+00> : vector<8x16xf32>
      %107 = vector.multi_reduction <add>, %106, %cst_20 [1] : vector<8x32x16xf32> to vector<8x16xf32>
      %108 = arith.mulf %104, %104 : vector<8x32x16xf32>
      %cst_21 = arith.constant 1.000000e+00 : f32
      %109 = vector.broadcast %cst_21 : f32 to vector<8x32x16xf32>
      %110 = arith.subf %109, %108 : vector<8x32x16xf32>
      %111 = arith.mulf %110, %103 : vector<8x32x16xf32>
      %112 = vector.broadcast %82 : vector<1x32x1xf32> to vector<8x32x16xf32>
      %113 = arith.mulf %111, %112 : vector<8x32x16xf32>
      %cst_22 = arith.constant dense<0.000000e+00> : vector<8x16xf32>
      %114 = vector.multi_reduction <add>, %113, %cst_22 [1] : vector<8x32x16xf32> to vector<8x16xf32>
      %cst_23 = arith.constant 0.628318548 : f32
      %115 = vector.broadcast %cst_23 : f32 to vector<8x16xf32>
      %116 = arith.mulf %115, %60 : vector<8x16xf32>
      %117 = math.cos %116 : vector<8x16xf32>
      %cst_24 = arith.constant 1.000000e+00 : f32
      %118 = vector.broadcast %cst_24 : f32 to vector<8x16xf32>
      %119 = arith.addf %117, %118 : vector<8x16xf32>
      %cst_25 = arith.constant 5.000000e-01 : f32
      %120 = vector.broadcast %cst_25 : f32 to vector<8x16xf32>
      %121 = arith.mulf %120, %119 : vector<8x16xf32>
      %122 = math.sin %116 : vector<8x16xf32>
      %cst_26 = arith.constant -0.314159274 : f32
      %123 = vector.broadcast %cst_26 : f32 to vector<8x16xf32>
      %124 = arith.mulf %123, %122 : vector<8x16xf32>
      %125 = arith.mulf %73, %76 : vector<8x16xf32>
      %126 = arith.mulf %125, %121 : vector<8x16xf32>
      %127 = arith.mulf %126, %107 : vector<8x16xf32>
      %128 = arith.mulf %124, %107 : vector<8x16xf32>
      %129 = arith.mulf %121, %114 : vector<8x16xf32>
      %130 = arith.addf %128, %129 : vector<8x16xf32>
      %131 = arith.mulf %125, %130 : vector<8x16xf32>
      %132 = tpu.reciprocal %60 {approx = true} : vector<8x16xf32> -> vector<8x16xf32>
      %133 = arith.mulf %131, %132 : vector<8x16xf32>
      %c0_27 = arith.constant 0 : index
      %c0_28 = arith.constant 0 : index
      %134 = vector.load %arg11[%c0_27, %c0_28] : memref<8x128xf32, #tpu.memory_space<vmem>>, vector<8x128xf32>
      %cst_29 = arith.constant dense<0.000000e+00> : vector<8x128xf32>
      %135 = tpu.matmul %133, %21, %cst_29 {dimension_numbers = #tpu.dot_dimension_numbers<[1], [0], [0], [1], [0, 0, 1, 1], [], []>} : vector<8x16xf32>, vector<16x128xf32>, vector<8x128xf32> -> vector<8x128xf32>
      %136 = arith.addf %134, %135 : vector<8x128xf32>
      %c0_30 = arith.constant 0 : index
      %c0_31 = arith.constant 0 : index
      %137 = vector.load %arg11[%c0_30, %c0_31] : memref<8x128xf32, #tpu.memory_space<vmem>>, vector<8x128xf32>
      tpu.vector_store %arg11[%c0_30, %c0_31], %136 {strides = array<i32>} : memref<8x128xf32, #tpu.memory_space<vmem>>, vector<8x128xf32>,
      %c0_32 = arith.constant 0 : index
      %c5 = arith.constant 5 : index
      %138 = vector.load %arg11[%c0_32, %c5] : memref<8x128xf32, #tpu.memory_space<vmem>>, vector<8x1xf32>
      %cst_33 = arith.constant dense<0.000000e+00> : vector<8xf32>
      %139 = vector.multi_reduction <add>, %127, %cst_33 [1] : vector<8x16xf32> to vector<8xf32>
      %140 = vector.shape_cast %139 : vector<8xf32> to vector<8x1xf32>
      %141 = arith.addf %138, %140 : vector<8x1xf32>
      %c0_34 = arith.constant 0 : index
      %c5_35 = arith.constant 5 : index
      %142 = vector.load %arg11[%c0_34, %c5_35] : memref<8x128xf32, #tpu.memory_space<vmem>>, vector<8x1xf32>
      tpu.vector_store %arg11[%c0_34, %c5_35], %141 {strides = array<i32>} : memref<8x128xf32, #tpu.memory_space<vmem>>, vector<8x1xf32>,
    } else {
    }
    %c0_i32_3 = arith.constant 0 : i32
    %18 = arith.cmpi eq, %arg1, %c0_i32_3 : i32
    %19 = arith.extui %18 : i1 to i32
    %c0_i32_4 = arith.constant 0 : i32
    %20 = arith.cmpi ne, %19, %c0_i32_4 : i32
    scf.if %20 {
      %c0_5 = arith.constant 0 : index
      %c0_6 = arith.constant 0 : index
      %21 = vector.load %arg11[%c0_5, %c0_6] : memref<8x128xf32, #tpu.memory_space<vmem>>, vector<8x3xf32>
      %c0_7 = arith.constant 0 : index
      %c4 = arith.constant 4 : index
      %22 = vector.load %arg11[%c0_7, %c4] : memref<8x128xf32, #tpu.memory_space<vmem>>, vector<8x1xf32>
      %23 = vector.broadcast %22 : vector<8x1xf32> to vector<8x3xf32>
      %24 = arith.mulf %23, %4 : vector<8x3xf32>
      %25 = arith.subf %21, %24 : vector<8x3xf32>
      %c0_8 = arith.constant 0 : index
      %c5 = arith.constant 5 : index
      %26 = vector.load %arg11[%c0_8, %c5] : memref<8x128xf32, #tpu.memory_space<vmem>>, vector<8x1xf32>
      %cst = arith.constant 5.000000e-01 : f32
      %27 = vector.broadcast %cst : f32 to vector<8x1xf32>
      %28 = arith.mulf %27, %26 : vector<8x1xf32>
      %29 = vector.shape_cast %4 : vector<8x3xf32> to vector<8x3x1xf32>
      %30 = vector.shape_cast %25 : vector<8x3xf32> to vector<8x1x3xf32>
      %31 = vector.broadcast %29 : vector<8x3x1xf32> to vector<8x3x3xf32>
      %32 = vector.broadcast %30 : vector<8x1x3xf32> to vector<8x3x3xf32>
      %33 = arith.mulf %31, %32 : vector<8x3x3xf32>
      %34 = vector.shape_cast %33 : vector<8x3x3xf32> to vector<8x9xf32>
      %cst_9 = arith.constant 0.000000e+00 : f32
      %35 = vector.broadcast %cst_9 : f32 to vector<8x115xf32>
      %36 = tpu.concatenate %25, %28, %34, %35 in 1 : vector<8x3xf32>, vector<8x1xf32>, vector<8x9xf32>, vector<8x115xf32> -> vector<8x128xf32>
      %c0_10 = arith.constant 0 : index
      %c0_11 = arith.constant 0 : index
      %37 = vector.load %arg10[%c0_10, %c0_11] : memref<8x128xf32, #tpu.memory_space<vmem>>, vector<8x128xf32>
      tpu.vector_store %arg10[%c0_10, %c0_11], %36 {strides = array<i32>} : memref<8x128xf32, #tpu.memory_space<vmem>>, vector<8x128xf32>,
    } else {
    }
    return
  }
  func.func @transform_0(%arg0: i32, %arg1: i32, %arg2: memref<2xi32, #tpu.memory_space<smem>>, %arg3: memref<2xi32, #tpu.memory_space<smem>>, %arg4: memref<1xi32, #tpu.memory_space<smem>>, %arg5: memref<1xi32, #tpu.memory_space<smem>>) -> (i32, i32) {
    %c0_i32 = arith.constant 0 : i32
    %c0_i32_0 = arith.constant 0 : i32
    return %arg0, %c0_i32 : i32, i32
  }
  func.func @transform_1(%arg0: i32, %arg1: i32, %arg2: memref<2xi32, #tpu.memory_space<smem>>, %arg3: memref<2xi32, #tpu.memory_space<smem>>, %arg4: memref<1xi32, #tpu.memory_space<smem>>, %arg5: memref<1xi32, #tpu.memory_space<smem>>) -> (i32, i32) {
    %c0_i32 = arith.constant 0 : i32
    %c0_i32_0 = arith.constant 0 : i32
    return %arg1, %c0_i32 : i32, i32
  }
  func.func @transform_2(%arg0: i32, %arg1: i32, %arg2: memref<2xi32, #tpu.memory_space<smem>>, %arg3: memref<2xi32, #tpu.memory_space<smem>>, %arg4: memref<1xi32, #tpu.memory_space<smem>>, %arg5: memref<1xi32, #tpu.memory_space<smem>>) -> (i32, i32) {
    %c0_i32 = arith.constant 0 : i32
    %c0_i32_0 = arith.constant 0 : i32
    %c0_i32_1 = arith.constant 0 : i32
    return %c0_i32, %c0_i32_0 : i32, i32
  }
  func.func @transform_3(%arg0: i32, %arg1: i32, %arg2: memref<2xi32, #tpu.memory_space<smem>>, %arg3: memref<2xi32, #tpu.memory_space<smem>>, %arg4: memref<1xi32, #tpu.memory_space<smem>>, %arg5: memref<1xi32, #tpu.memory_space<smem>>) -> (i32, i32) {
    %c0_i32 = arith.constant 0 : i32
    %c0_i32_0 = arith.constant 0 : i32
    %c0_i32_1 = arith.constant 0 : i32
    return %c0_i32, %c0_i32_0 : i32, i32
  }
  func.func @transform_4(%arg0: i32, %arg1: i32, %arg2: memref<2xi32, #tpu.memory_space<smem>>, %arg3: memref<2xi32, #tpu.memory_space<smem>>, %arg4: memref<1xi32, #tpu.memory_space<smem>>, %arg5: memref<1xi32, #tpu.memory_space<smem>>) -> (i32, i32) {
    %c0_i32 = arith.constant 0 : i32
    %c0_i32_0 = arith.constant 0 : i32
    return %arg0, %c0_i32 : i32, i32
  }
}

</mosaic_0001>

<llo_original>
// kernel: mattersim_forward.1
$region0: #{mattersim_forward.1}
  #allocation0 [shape = 'u32[]', space=smem, size = 0x4, offset = 0x4, fixed_abs, tag = 'smem constant byte address 0x4 - core index']
  #allocation1 [shape = 'u32[144,128]{1,0:T(1,128)}', space=vmem, size = 0x12000, scoped, tag = 'internal scratch']
  #allocation2 [shape = 'f32[8,128]{1,0:T(8,128)}', space=vmem, size = 0x1000, scoped, tag = 'scratch operand']
  #allocation3 [shape = 's32[1]{0}', space=sflag, size = 0x4, scoped, tag = 'scoped memory for mattersim_forward.1']
  #allocation4 [shape = 'u8[512]{0}', space=smem, size = 0x200, scoped, tag = 'prefetched SMEM operand 0']
  #allocation5 [shape = 'u8[512]{0}', space=smem, size = 0x200, scoped, tag = 'prefetched SMEM operand 1']
  #allocation6 [shape = 's32[1]{0:T(128)S(6)}', space=smem, size = 0x200, scoped, tag = 'prefetched SMEM operand 2']
  #allocation7 [shape = 's32[1]{0:T(128)S(6)}', space=smem, size = 0x200, scoped, tag = 'prefetched SMEM operand 3']
  %s0 = inlined_call_operand.vmem [shape: s32[2], index: 0, kind: input, shape index: {}]
  %s1 = inlined_call_operand.vmem [shape: s32[2], index: 1, kind: input, shape index: {}]
  %s2 = inlined_call_operand.<no memory space> [shape: s32[1], index: 2, kind: input, shape index: {}]
  %s3 = inlined_call_operand.<no memory space> [shape: s32[1], index: 3, kind: input, shape index: {}]
  %s4 = inlined_call_operand.vmem [shape: f32[16,128], index: 4, kind: input, shape index: {}, may-alias: {4,5}]
  %s5 = inlined_call_operand.vmem [shape: f32[16,128], index: 5, kind: input, shape index: {}, may-alias: {4,5}]
  %s6 = inlined_call_operand.vmem [shape: bf16[32,32], index: 6, kind: input, shape index: {}]
  %s7 = inlined_call_operand.vmem [shape: f32[32,128], index: 7, kind: input, shape index: {}]
  %s8 = inlined_call_operand.vmem [shape: f32[16,128], index: 8, kind: output, shape index: {}]
  %s9 = sld [smem:[#allocation0]]
  $region61: #{mattersim_forward.1} parent=0
    _
  %s11 = ssub.s32 1, %s9
  %s12 = scalar_select 0, %s11, %s9
  %s13 = sshll.u32 %s0, 4
  %s14 = int_to_ptr.vmem [resolvable:$true] %s13
  %16 = dma.vmem_to_smem %s14, 16, [#allocation4], [#allocation3]
  %s17 = sshll.u32 %s1, 4
  %s18 = int_to_ptr.vmem [resolvable:$true] %s17
  %20 = dma.vmem_to_smem %s18, 16, [#allocation5], [#allocation3]
  %21 = sst [smem:[#allocation6]] %s2
  %22 = sst [smem:[#allocation7]] %s3
  %23 = dma.done [#allocation3], 32
  %24 = sfence
  loop: start=0, step=1, limit=4
  $region2: #{mattersim_forward.1} parent=0 // loop_pre_header
    _
  $region3: #{mattersim_forward.1} parent=0 // loop_header
    %s26 = sphi 0, %s30
    %p27 = scmp.ge.s32.totalorder %s26, 4
    %s33 = sphi 0, %s45
    %s34 = sphi 0, %s41
    %s35 = sphi 0, %s33
    %s36 = sphi 0, %s34
    %s37 = sphi 0, %s35
    %s38 = sphi 0, %s36
    %s48 = sphi 0, %s50
    %s51 = sphi 0, %s48
    %s52 = sphi 0, %s51
    %s68 = sphi 0, %s52
    %s74 = sphi 0, %s76
    %s77 = sphi 0, %s74
    %s78 = sphi 0, %s77
    %s94 = sphi 0, %s78
    %s98 = sphi 0, %s98
    %s100 = sphi 0, %s98
    %s101 = sphi 0, %s100
    %s115 = sphi 0, %s101
    %s119 = sphi 0, %s119
    %s121 = sphi 0, %s119
    %s122 = sphi 0, %s121
    %s136 = sphi 0, %s122
    %s142 = sphi 0, %s144
    %s145 = sphi 0, %s142
    %s146 = sphi 0, %s145
    %s162 = sphi 0, %s146
  $region4: #{mattersim_forward.1} parent=0 // loop_header_branch
    %29 = sbr.rel (%p27) target = $region8
  $region5: #{mattersim_forward.1} parent=0 // loop_body
    %s31 = ssub.s32 %s26, 1
    %s32 = ssub.s32 %s26, 2
    %s39 = sadd.s32 1, %s34
    %p40 = scmp.ge.s32.totalorder %s39, 1
    %s41 = scalar_select %p40, 0, %s39
    %s42 = sadd.s32 1, %s33
    %s43 = scalar_select %p40, %s42, %s33
    %p44 = scmp.ge.s32.totalorder %s43, 2
    %s45 = scalar_select %p44, 0, %s43
    %s46 = ssub.s32 %s33, %s45
    %p47 = scmp.eq.s32.totalorder %s46, 0
    %s49 = sadd.s32 %s48, 1
    %s50 = scalar_select %p47, %s48, %s49
    %p53 = pneg %p47
    %p54 = scmp.eq.s32.totalorder %s26, 1
    %p55 = por %p53, %p54
    %p56 = scmp.ne.s32.totalorder %s48, %s51
    %p57 = scmp.eq.s32.totalorder %s26, 0
    %p58 = por %p56, %p57
    %p59 = scmp.ne.s32.totalorder %s48, %s51
    %p60 = scmp.eq.s32.totalorder %s31, 1
    %p61 = por %p59, %p60
    %p62 = scmp.ne.s32.totalorder %s51, %s52
    %p63 = scmp.eq.s32.totalorder %s31, 0
    %p64 = por %p62, %p63
    %p65 = scmp.ne.s32.totalorder %s51, %s52
    %p66 = scmp.eq.s32.totalorder %s32, 1
    %p67 = por %p65, %p66
    %p69 = scmp.ne.s32.totalorder %s52, %s68
    %p70 = scmp.eq.s32.totalorder %s32, 0
    %p71 = por %p69, %p70
    %s72 = ssub.s32 %s34, %s41
    %p73 = scmp.eq.s32.totalorder %s72, 0
    %s75 = sadd.s32 %s74, 1
    %s76 = scalar_select %p73, %s74, %s75
    %p79 = pneg %p73
    %p80 = scmp.eq.s32.totalorder %s26, 1
    %p81 = por %p79, %p80
    %p82 = scmp.ne.s32.totalorder %s74, %s77
    %p83 = scmp.eq.s32.totalorder %s26, 0
    %p84 = por %p82, %p83
    %p85 = scmp.ne.s32.totalorder %s74, %s77
    %p86 = scmp.eq.s32.totalorder %s31, 1
    %p87 = por %p85, %p86
    %p88 = scmp.ne.s32.totalorder %s77, %s78
    %p89 = scmp.eq.s32.totalorder %s31, 0
    %p90 = por %p88, %p89
    %p91 = scmp.ne.s32.totalorder %s77, %s78
    %p92 = scmp.eq.s32.totalorder %s32, 1
    %p93 = por %p91, %p92
    %p95 = scmp.ne.s32.totalorder %s78, %s94
    %p96 = scmp.eq.s32.totalorder %s32, 0
    %p97 = por %p95, %p96
    %s99 = sadd.s32 %s98, 1
    %p102 = scmp.eq.s32.totalorder %s26, 1
    %p103 = scmp.ne.s32.totalorder %s98, %s100
    %p104 = scmp.eq.s32.totalorder %s26, 0
    %p105 = por %p103, %p104
    %p106 = scmp.ne.s32.totalorder %s98, %s100
    %p107 = scmp.eq.s32.totalorder %s31, 1
    %p108 = por %p106, %p107
    %p109 = scmp.ne.s32.totalorder %s100, %s101
    %p110 = scmp.eq.s32.totalorder %s31, 0
    %p111 = por %p109, %p110
    %p112 = scmp.ne.s32.totalorder %s100, %s101
    %p113 = scmp.eq.s32.totalorder %s32, 1
    %p114 = por %p112, %p113
    %p116 = scmp.ne.s32.totalorder %s101, %s115
    %p117 = scmp.eq.s32.totalorder %s32, 0
    %p118 = por %p116, %p117
    %s120 = sadd.s32 %s119, 1
    %p123 = scmp.eq.s32.totalorder %s26, 1
    %p124 = scmp.ne.s32.totalorder %s119, %s121
    %p125 = scmp.eq.s32.totalorder %s26, 0
    %p126 = por %p124, %p125
    %p127 = scmp.ne.s32.totalorder %s119, %s121
    %p128 = scmp.eq.s32.totalorder %s31, 1
    %p129 = por %p127, %p128
    %p130 = scmp.ne.s32.totalorder %s121, %s122
    %p131 = scmp.eq.s32.totalorder %s31, 0
    %p132 = por %p130, %p131
    %p133 = scmp.ne.s32.totalorder %s121, %s122
    %p134 = scmp.eq.s32.totalorder %s32, 1
    %p135 = por %p133, %p134
    %p137 = scmp.ne.s32.totalorder %s122, %s136
    %p138 = scmp.eq.s32.totalorder %s32, 0
    %p139 = por %p137, %p138
    %s140 = ssub.s32 %s33, %s45
    %p141 = scmp.eq.s32.totalorder %s140, 0
    %s143 = sadd.s32 %s142, 1
    %s144 = scalar_select %p141, %s142, %s143
    %p147 = pneg %p141
    %p148 = scmp.eq.s32.totalorder %s26, 1
    %p149 = por %p147, %p148
    %p150 = scmp.ne.s32.totalorder %s142, %s145
    %p151 = scmp.eq.s32.totalorder %s26, 0
    %p152 = por %p150, %p151
    %p153 = scmp.ne.s32.totalorder %s142, %s145
    %p154 = scmp.eq.s32.totalorder %s31, 1
    %p155 = por %p153, %p154
    %p156 = scmp.ne.s32.totalorder %s145, %s146
    %p157 = scmp.eq.s32.totalorder %s31, 0
    %p158 = por %p156, %p157
    %p159 = scmp.ne.s32.totalorder %s145, %s146
    %p160 = scmp.eq.s32.totalorder %s32, 1
    %p161 = por %p159, %p160
    %p163 = scmp.ne.s32.totalorder %s146, %s162
    %p164 = scmp.eq.s32.totalorder %s32, 0
    %p165 = por %p163, %p164
    %p166 = scmp.le.s32.totalorder 1, %s26
    %p167 = scmp.lt.s32.totalorder %s26, 3
    %p168 = pnand %p166, %p167
    %p169 = pneg %p168
    // Predicated region
    $region9: #{mattersim_forward.1} parent=5 // pred_check
      _
    $region10: #{mattersim_forward.1} parent=5 // pred_check_branch
      %171 = sbr.rel (%p168) target = $region12
    $region11: #{mattersim_forward.1} parent=5 // pred_region
      %s172 = ssub.s32 %s26, 1
      // Predicated region
      $region13: #{mattersim_forward.1} parent=11 // pred_check
        %p173 = pneg %p90
      $region14: #{mattersim_forward.1} parent=11 // pred_check_branch
        %175 = sbr.rel (%p173) target = $region16
      $region15: #{mattersim_forward.1} parent=11 // pred_region
        %s176 = smul.u32 2, %s36
        %p177 = scmp.lt.s32.totalorder %s176, 1
        %s178 = scalar_select %p177, %s176, 1
        %s179 = smul.addr %s178, 8
        %s180 = scalar_lea.vmem %s5, %s179
        %s181 = smul.u32 2, %s36
      $region16: #{mattersim_forward.1} parent=11 // pred_fallthru
        _
      // Predicated region
      $region17: #{mattersim_forward.1} parent=11 // pred_check
        %p182 = pneg %p111
      $region18: #{mattersim_forward.1} parent=11 // pred_check_branch
        %184 = sbr.rel (%p182) target = $region20
      $region19: #{mattersim_forward.1} parent=11 // pred_region
        _
      $region20: #{mattersim_forward.1} parent=11 // pred_fallthru
        _
      // Predicated region
      $region21: #{mattersim_forward.1} parent=11 // pred_check
        %p185 = pneg %p132
      $region22: #{mattersim_forward.1} parent=11 // pred_check_branch
        %187 = sbr.rel (%p185) target = $region24
      $region23: #{mattersim_forward.1} parent=11 // pred_region
        _
      $region24: #{mattersim_forward.1} parent=11 // pred_fallthru
        _
    $region12: #{mattersim_forward.1} parent=5 // pred_fallthru
      _
    %p188 = scmp.lt.s32.totalorder %s26, 2
    // Predicated region
    $region25: #{mattersim_forward.1} parent=5 // pred_check
      %p189 = pneg %p188
    $region26: #{mattersim_forward.1} parent=5 // pred_check_branch
      %191 = sbr.rel (%p189) target = $region28
    $region27: #{mattersim_forward.1} parent=5 // pred_region
      // Predicated region
      $region29: #{mattersim_forward.1} parent=27 // pred_check
        %p192 = pneg %p58
      $region30: #{mattersim_forward.1} parent=27 // pred_check_branch
        %194 = sbr.rel (%p192) target = $region32
      $region31: #{mattersim_forward.1} parent=27 // pred_region
        %p195 = scmp.lt.s32.totalorder %s33, 1
        %s196 = scalar_select %p195, %s33, 1
        %s197 = smul.addr %s196, 8
        %s198 = scalar_lea.vmem %s4, %s197
      $region32: #{mattersim_forward.1} parent=27 // pred_fallthru
        _
    $region28: #{mattersim_forward.1} parent=5 // pred_fallthru
      _
    %p199 = scmp.le.s32.totalorder 1, %s26
    %p200 = scmp.lt.s32.totalorder %s26, 3
    %p201 = pnand %p199, %p200
    %p202 = pneg %p201
    // Predicated region
    $region33: #{mattersim_forward.1} parent=5 // pred_check
      _
    $region34: #{mattersim_forward.1} parent=5 // pred_check_branch
      %204 = sbr.rel (%p201) target = $region36
    $region35: #{mattersim_forward.1} parent=5 // pred_region
      %s205 = ssub.s32 %s26, 1
      %p206 = scmp.lt.s32.totalorder %s35, 1
      %s207 = scalar_select %p206, %s35, 1
      %s208 = smul.addr %s207, 8
      %s209 = scalar_lea.vmem %s4, %s208
      %p210 = pneg %p64
      %p211 = pneg %p61
      %s212 = smul.u32 2, %s36
      %p213 = scmp.lt.s32.totalorder %s212, 1
      %s214 = scalar_select %p213, %s212, 1
      %s215 = smul.addr %s214, 8
      %s216 = scalar_lea.vmem %s5, %s215
      %p217 = pneg %p90
      %p218 = pneg %p87
      %p219 = pneg %p111
      %p220 = pneg %p108
      %p221 = pneg %p132
      %p222 = pneg %p129
      %p223 = pneg %p158
      %p224 = pneg %p155
      %p225 = scmp.lt.s32.totalorder %s35, 1
      %s226 = scalar_select %p225, %s35, 1
      %s227 = smul.addr %s226, 8
      %s228 = scalar_lea.vmem %s8, %s227
      %p229 = scmp.lt.s32.totalorder %s35, 1
      %s230 = scalar_select %p229, %s35, 1
      %s231 = smul.addr %s230, 8
      %s232 = scalar_lea.vmem %s4, %s231
      %s233 = smul.u32 2, %s36
      %p234 = scmp.lt.s32.totalorder %s233, 1
      %s235 = scalar_select %p234, %s233, 1
      %s236 = smul.addr %s235, 8
      %s237 = scalar_lea.vmem %s5, %s236
      %s238 = smul.u32 2, %s36
      %p239 = scmp.lt.s32.totalorder %s35, 1
      %s240 = scalar_select %p239, %s35, 1
      %s241 = smul.addr %s240, 8
      %s242 = scalar_lea.vmem %s8, %s241
      %p244 = scmp.eq.s32.totalorder %s36, 0
      // Predicated region
      $region37: #{mattersim_forward.1} parent=35 // pred_check
        %p245 = pneg %p244
      $region38: #{mattersim_forward.1} parent=35 // pred_check_branch
        %247 = sbr.rel (%p245) target = $region40
      $region39: #{mattersim_forward.1} parent=35 // pred_region
        %248 = vst [vmem:[#allocation2] sm:$0xff] 0.0
      $region40: #{mattersim_forward.1} parent=35 // pred_fallthru
        _
      %v249 = vld [vmem:[%s232] sm:$0xff]
      %s250 = sld [smem:[#allocation4 + %s35]]
      %s251 = sld [smem:[#allocation7 + %s36]]
      %p252 = scmp.le.s32.totalorder %s250, %s251
      %s253 = sld [smem:[#allocation6 + %s36]]
      %s254 = sld [smem:[#allocation5 + %s35]]
      %p255 = scmp.le.s32.totalorder %s253, %s254
      %p256 = pnand %p252, %p255
      %p257 = pneg %p256
      // Predicated region
      $region41: #{mattersim_forward.1} parent=35 // pred_check
        _
      $region42: #{mattersim_forward.1} parent=35 // pred_check_branch
        %259 = sbr.rel (%p256) target = $region44
      $region43: #{mattersim_forward.1} parent=35 // pred_region
        %v260 = vld [vmem:[%s237] sm:$0xff]
        %v261 = vld [vmem:[%s237 + $0x8] sm:$0xff]
        %262 = vxpose.xlu0.b32.start [1/16] %v260, 128
        %263 = vxpose.xlu0.b32.cont [2/16] %v261, 128
        %264 = vxpose.xlu0.b32.cont [3/16] 0.0, 128
        %265 = vxpose.xlu0.b32.cont [4/16] 0.0, 128
        %266 = vxpose.xlu0.b32.cont [5/16] 0.0, 128
        %267 = vxpose.xlu0.b32.cont [6/16] 0.0, 128
        %268 = vxpose.xlu0.b32.cont [7/16] 0.0, 128
        %269 = vxpose.xlu0.b32.cont [8/16] 0.0, 128
        %270 = vxpose.xlu0.b32.cont [9/16] 0.0, 128
        %271 = vxpose.xlu0.b32.cont [10/16] 0.0, 128
        %272 = vxpose.xlu0.b32.cont [11/16] 0.0, 128
        %273 = vxpose.xlu0.b32.cont [12/16] 0.0, 128
        %274 = vxpose.xlu0.b32.cont [13/16] 0.0, 128
        %275 = vxpose.xlu0.b32.cont [14/16] 0.0, 128
        %276 = vxpose.xlu0.b32.cont [15/16] 0.0, 128
        %277 = vxpose.xlu0.b32.end [16/16] 0.0, 128
        %v278 = vpop.trf.xlu0
        %v279 = vpop.trf.xlu0
        %v280 = vpop.trf.xlu0
        %v281 = vpop.trf.xlu0
        %v282 = vpop.trf.xlu0
        %v283 = vpop.trf.xlu0
        %v284 = vpop.trf.xlu0
        %v285 = vpop.trf.xlu0
        %v286 = vpop.trf.xlu0
        %v287 = vpop.trf.xlu0
        %v288 = vpop.trf.xlu0
        %v289 = vpop.trf.xlu0
        %v290 = vpop.trf.xlu0
        %v291 = vpop.trf.xlu0
        %v292 = vpop.trf.xlu0
        %v293 = vpop.trf.xlu0
        %295 = vset.pattern.permute.xlu0 0
        %296 = vperm.xlu0 %295, %v249
        %v297 = vpop.permute.xlu0 %296
        %v299 = vlaneseq
        %v300 = vshrl.u32 %v299, 7
        %v301 = vsub.s32 0, %v300
        %v302 = vrot.slane %v278, %v301
        %v303 = vsub.f32 %v297, %v302
        %306 = vrot.lane.b32.xlu0 %v260, 127
        %v307 = vpop.permute.xlu0 %306
        %308 = vrot.lane.b32.xlu0 %v261, 127
        %v309 = vpop.permute.xlu0 %308
        %312 = vxpose.xlu0.b32.start [1/16] %v307, 128
        %313 = vxpose.xlu0.b32.cont [2/16] %v309, 128
        %314 = vxpose.xlu0.b32.cont [3/16] 0.0, 128
        %315 = vxpose.xlu0.b32.cont [4/16] 0.0, 128
        %316 = vxpose.xlu0.b32.cont [5/16] 0.0, 128
        %317 = vxpose.xlu0.b32.cont [6/16] 0.0, 128
        %318 = vxpose.xlu0.b32.cont [7/16] 0.0, 128
        %319 = vxpose.xlu0.b32.cont [8/16] 0.0, 128
        %320 = vxpose.xlu0.b32.cont [9/16] 0.0, 128
        %321 = vxpose.xlu0.b32.cont [10/16] 0.0, 128
        %322 = vxpose.xlu0.b32.cont [11/16] 0.0, 128
        %323 = vxpose.xlu0.b32.cont [12/16] 0.0, 128
        %324 = vxpose.xlu0.b32.cont [13/16] 0.0, 128
        %325 = vxpose.xlu0.b32.cont [14/16] 0.0, 128
        %326 = vxpose.xlu0.b32.cont [15/16] 0.0, 128
        %327 = vxpose.xlu0.b32.end [16/16] 0.0, 128
        %v328 = vpop.trf.xlu0
        %v329 = vpop.trf.xlu0
        %v330 = vpop.trf.xlu0
        %v331 = vpop.trf.xlu0
        %v332 = vpop.trf.xlu0
        %v333 = vpop.trf.xlu0
        %v334 = vpop.trf.xlu0
        %v335 = vpop.trf.xlu0
        %v336 = vpop.trf.xlu0
        %v337 = vpop.trf.xlu0
        %v338 = vpop.trf.xlu0
        %v339 = vpop.trf.xlu0
        %v340 = vpop.trf.xlu0
        %v341 = vpop.trf.xlu0
        %v342 = vpop.trf.xlu0
        %v343 = vpop.trf.xlu0
        %344 = vset.pattern.permute.xlu0 1
        %345 = vperm.xlu0 %344, %v249
        %v346 = vpop.permute.xlu0 %345
        %v348 = vlaneseq
        %v349 = vshrl.u32 %v348, 7
        %v350 = vsub.s32 0, %v349
        %v351 = vrot.slane %v328, %v350
        %v352 = vsub.f32 %v346, %v351
        %353 = vrot.lane.b32.xlu0 %v260, 126
        %v354 = vpop.permute.xlu0 %353
        %355 = vrot.lane.b32.xlu0 %v261, 126
        %v356 = vpop.permute.xlu0 %355
        %359 = vxpose.xlu0.b32.start [1/16] %v354, 128
        %360 = vxpose.xlu0.b32.cont [2/16] %v356, 128
        %361 = vxpose.xlu0.b32.cont [3/16] 0.0, 128
        %362 = vxpose.xlu0.b32.cont [4/16] 0.0, 128
        %363 = vxpose.xlu0.b32.cont [5/16] 0.0, 128
        %364 = vxpose.xlu0.b32.cont [6/16] 0.0, 128
        %365 = vxpose.xlu0.b32.cont [7/16] 0.0, 128
        %366 = vxpose.xlu0.b32.cont [8/16] 0.0, 128
        %367 = vxpose.xlu0.b32.cont [9/16] 0.0, 128
        %368 = vxpose.xlu0.b32.cont [10/16] 0.0, 128
        %369 = vxpose.xlu0.b32.cont [11/16] 0.0, 128
        %370 = vxpose.xlu0.b32.cont [12/16] 0.0, 128
        %371 = vxpose.xlu0.b32.cont [13/16] 0.0, 128
        %372 = vxpose.xlu0.b32.cont [14/16] 0.0, 128
        %373 = vxpose.xlu0.b32.cont [15/16] 0.0, 128
        %374 = vxpose.xlu0.b32.end [16/16] 0.0, 128
        %v375 = vpop.trf.xlu0
        %v376 = vpop.trf.xlu0
        %v377 = vpop.trf.xlu0
        %v378 = vpop.trf.xlu0
        %v379 = vpop.trf.xlu0
        %v380 = vpop.trf.xlu0
        %v381 = vpop.trf.xlu0
        %v382 = vpop.trf.xlu0
        %v383 = vpop.trf.xlu0
        %v384 = vpop.trf.xlu0
        %v385 = vpop.trf.xlu0
        %v386 = vpop.trf.xlu0
        %v387 = vpop.trf.xlu0
        %v388 = vpop.trf.xlu0
        %v389 = vpop.trf.xlu0
        %v390 = vpop.trf.xlu0
        %391 = vset.pattern.permute.xlu0 2
        %392 = vperm.xlu0 %391, %v249
        %v393 = vpop.permute.xlu0 %392
        %v395 = vlaneseq
        %v396 = vshrl.u32 %v395, 7
        %v397 = vsub.s32 0, %v396
        %v398 = vrot.slane %v375, %v397
        %v399 = vsub.f32 %v393, %v398
        %v400 = vmul.f32 %v303, %v303
        %v401 = vmul.f32 %v352, %v352
        %v402 = vadd.f32 %v400, %v401
        %v403 = vmul.f32 %v399, %v399
        %v404 = vadd.f32 %v402, %v403
        %v405 = vlaneseq
        %v406 = vshrl.u32 %v405, 7
        %s407 = smul.u32 %s35, 8
        %v408 = vstv %s407
        %v409 = vadd.s32 %v406, %v408
        %v410 = vlaneseq
        %v411 = vand.u32 %v410, 127
        %s412 = smul.u32 %s36, 16
        %v413 = vstv %s412
        %v414 = vadd.s32 %v411, %v413
        %vm415 = vcmp.eq.s32.totalorder %v409, %v414
        %v416 = vsel %vm415, 1, 0
        %v417 = vcvt.s32.f32 %v416
        %v418 = vadd.f32 %v404, %v417
        %v419 = vadd.f32 %v418, 1e-12
        %v420 = vrsqrt.pop %v419
        %v421 = vmul.f32 %v419, %v420
        %vm422 = vcmp.eq.f32.partialorder %v419, inf
        %v423 = vsel %vm422, %v419, %v421
        %vm424 = vcmp.eq.f32.partialorder %v419, 0.0
        %v425 = vand.u32 %v419, 2147483648
        %v426 = vsel %vm424, %v425, %v423
        %427 = vrot.lane.b32.xlu0 %v260, 125
        %v428 = vpop.permute.xlu0 %427
        %429 = vrot.lane.b32.xlu0 %v261, 125
        %v430 = vpop.permute.xlu0 %429
        %433 = vxpose.xlu0.b32.start [1/16] %v428, 128
        %434 = vxpose.xlu0.b32.cont [2/16] %v430, 128
        %435 = vxpose.xlu0.b32.cont [3/16] 0.0, 128
        %436 = vxpose.xlu0.b32.cont [4/16] 0.0, 128
        %437 = vxpose.xlu0.b32.cont [5/16] 0.0, 128
        %438 = vxpose.xlu0.b32.cont [6/16] 0.0, 128
        %439 = vxpose.xlu0.b32.cont [7/16] 0.0, 128
        %440 = vxpose.xlu0.b32.cont [8/16] 0.0, 128
        %441 = vxpose.xlu0.b32.cont [9/16] 0.0, 128
        %442 = vxpose.xlu0.b32.cont [10/16] 0.0, 128
        %443 = vxpose.xlu0.b32.cont [11/16] 0.0, 128
        %444 = vxpose.xlu0.b32.cont [12/16] 0.0, 128
        %445 = vxpose.xlu0.b32.cont [13/16] 0.0, 128
        %446 = vxpose.xlu0.b32.cont [14/16] 0.0, 128
        %447 = vxpose.xlu0.b32.cont [15/16] 0.0, 128
        %448 = vxpose.xlu0.b32.end [16/16] 0.0, 128
        %v449 = vpop.trf.xlu0
        %v450 = vpop.trf.xlu0
        %v451 = vpop.trf.xlu0
        %v452 = vpop.trf.xlu0
        %v453 = vpop.trf.xlu0
        %v454 = vpop.trf.xlu0
        %v455 = vpop.trf.xlu0
        %v456 = vpop.trf.xlu0
        %v457 = vpop.trf.xlu0
        %v458 = vpop.trf.xlu0
        %v459 = vpop.trf.xlu0
        %v460 = vpop.trf.xlu0
        %v461 = vpop.trf.xlu0
        %v462 = vpop.trf.xlu0
        %v463 = vpop.trf.xlu0
        %v464 = vpop.trf.xlu0
        %465 = vset.pattern.permute.xlu0 3
        %466 = vperm.xlu0 %465, %v249
        %v467 = vpop.permute.xlu0 %466
        %v469 = vlaneseq
        %v470 = vshrl.u32 %v469, 7
        %v471 = vsub.s32 0, %v470
        %v472 = vrot.slane %v449, %v471
        %vm473 = vcmp.eq.f32.partialorder %v467, %v472
        %vm474 = vmxor %vm415, 1
        %vm475 = vmand %vm473, %vm474
        %vm476 = vcmp.lt.f32.partialorder %v426, 5.0
        %vm477 = vmand %vm475, %vm476
        %v478 = vsel %vm477, 1, 0
        %v479 = vcvt.s32.f32 %v478
        %480 = vrot.lane.b32.xlu0 %v249, 120
        %v481 = vpop.permute.xlu0 %480
        %482 = vrot.lane.b32.xlu0 %v260, 120
        %v483 = vpop.permute.xlu0 %482
        %484 = vrot.lane.b32.xlu0 %v261, 120
        %v485 = vpop.permute.xlu0 %484
        %vm486 = vcmask 130048
        %v487 = vsel %vm486, %v481, 0
        %v489 = vsel %vm486, %v483, 0
        %v491 = vsel %vm486, %v485, 0
        %493 = vmatprep.subr.mxu0 0.0
        %494 = vmatpush1.xpose.msra.mxu0 0.0
        %495 = vmatprep.subr.mxu0 0.0
        %496 = vmatpush1.xpose.msra.mxu0 0.0
        %497 = vmatprep.subr.mxu0 0.0
        %498 = vmatpush1.xpose.msra.mxu0 0.0
        %499 = vmatprep.subr.mxu0 0.0
        %500 = vmatpush1.xpose.msra.mxu0 0.0
        %501 = vmatprep.subr.mxu0 0.0
        %502 = vmatpush1.xpose.msra.mxu0 0.0
        %503 = vmatprep.subr.mxu0 0.0
        %504 = vmatpush1.xpose.msra.mxu0 0.0
        %505 = vmatprep.subr.mxu0 0.0
        %506 = vmatpush1.xpose.msra.mxu0 0.0
        %507 = vmatprep.subr.mxu0 0.0
        %508 = vmatpush1.xpose.msra.mxu0 0.0
        %509 = vmatprep.subr.mxu0 0.0
        %510 = vmatpush1.xpose.msra.mxu0 0.0
        %511 = vmatprep.subr.mxu0 0.0
        %512 = vmatpush1.xpose.msra.mxu0 0.0
        %513 = vmatprep.subr.mxu0 0.0
        %514 = vmatpush1.xpose.msra.mxu0 0.0
        %515 = vmatprep.subr.mxu0 0.0
        %516 = vmatpush1.xpose.msra.mxu0 0.0
        %517 = vmatprep.subr.mxu0 0.0
        %518 = vmatpush1.xpose.msra.mxu0 0.0
        %519 = vmatprep.subr.mxu0 0.0
        %520 = vmatpush1.xpose.msra.mxu0 0.0
        %521 = vmatprep.subr.mxu0 0.0
        %522 = vmatpush1.xpose.msra.mxu0 %v491
        %523 = vmatprep.subr.mxu0 0.0
        %524 = vmatpush1.xpose.msra.mxu0 %v489
        %525 = vmatprep.subr.mxu0 0.0
        %526 = vmatpush2.xpose.msra.mxu0 0.0
        %527 = vmatprep.subr.mxu0 0.0
        %528 = vmatpush2.xpose.msra.mxu0 0.0
        %529 = vmatprep.subr.mxu0 0.0
        %530 = vmatpush2.xpose.msra.mxu0 0.0
        %531 = vmatprep.subr.mxu0 0.0
        %532 = vmatpush2.xpose.msra.mxu0 0.0
        %533 = vmatprep.subr.mxu0 0.0
        %534 = vmatpush2.xpose.msra.mxu0 0.0
        %535 = vmatprep.subr.mxu0 0.0
        %536 = vmatpush2.xpose.msra.mxu0 0.0
        %537 = vmatprep.subr.mxu0 0.0
        %538 = vmatpush2.xpose.msra.mxu0 0.0
        %539 = vmatprep.subr.mxu0 0.0
        %540 = vmatpush2.xpose.msra.mxu0 0.0
        %541 = vmatprep.subr.mxu0 0.0
        %542 = vmatpush2.xpose.msra.mxu0 0.0
        %543 = vmatprep.subr.mxu0 0.0
        %544 = vmatpush2.xpose.msra.mxu0 0.0
        %545 = vmatprep.subr.mxu0 0.0
        %546 = vmatpush2.xpose.msra.mxu0 0.0
        %547 = vmatprep.subr.mxu0 0.0
        %548 = vmatpush2.xpose.msra.mxu0 0.0
        %549 = vmatprep.subr.mxu0 0.0
        %550 = vmatpush2.xpose.msra.mxu0 0.0
        %551 = vmatprep.subr.mxu0 0.0
        %552 = vmatpush2.xpose.msra.mxu0 0.0
        %553 = vmatprep.subr.mxu0 0.0
        %554 = vmatpush2.xpose.msra.mxu0 0.0
        %555 = vmatprep.subr.mxu0 0.0
        %556 = vmatpush2.xpose.msra.mxu0 0.0
        %557 = vmatprep.mubr.f32.mxu0 0.0
        %558 = vmatmul.mubr.f32.gmra.mxu0 %v487
        %v559 = vpop.f32.mrf.mxu0
        %v560 = vadd.f32 0.0, %v559
        %v561 = vpop.f32.mrf.mxu0
        %562 = vdwg.mxu0
        %v563 = vld [vmem:[%s7] sm:$0xff]
        %v564 = vld [vmem:[%s7 + $0x8] sm:$0xff]
        %v565 = vld [vmem:[%s7 + $0x10] sm:$0xff]
        %v566 = vld [vmem:[%s7 + $0x18] sm:$0xff]
        %v568 = vcombine.high %v426, %v426
        %v570 = vunpack.c.l.s4 1966171168
        %v571 = vunpack.c.0.s8 %v570
        %v572 = vlaneseq
        %v573 = vshrl.u32 %v572, 7
        %v574 = vsub.s32 %v571, %v573
        %v575 = vrot.slane %v426, %v574
        %v577 = vunpack.c.l.s4 1966171168
        %v578 = vunpack.c.0.s8 %v577
        %v579 = vlaneseq
        %v580 = vshrl.u32 %v579, 7
        %v581 = vsub.s32 %v578, %v580
        %v582 = vrot.slane %v568, %v581
        %v583 = vcombine.high %v575, %v575
        %v584 = vcombine.high %v582, %v582
        %v586 = vunpack.c.l.s4 1966171168
        %v587 = vunpack.c.0.s8 %v586
        %v588 = vlaneseq
        %v589 = vshrl.u32 %v588, 7
        %v590 = vsub.s32 %v587, %v589
        %v591 = vrot.slane %v575, %v590
        %v593 = vunpack.c.l.s4 1966171168
        %v594 = vunpack.c.0.s8 %v593
        %v595 = vlaneseq
        %v596 = vshrl.u32 %v595, 7
        %v597 = vsub.s32 %v594, %v596
        %v598 = vrot.slane %v582, %v597
        %v600 = vunpack.c.l.s4 1966171168
        %v601 = vunpack.c.0.s8 %v600
        %v602 = vlaneseq
        %v603 = vshrl.u32 %v602, 7
        %v604 = vsub.s32 %v601, %v603
        %v605 = vrot.slane %v583, %v604
        %v607 = vunpack.c.l.s4 1966171168
        %v608 = vunpack.c.0.s8 %v607
        %v609 = vlaneseq
        %v610 = vshrl.u32 %v609, 7
        %v611 = vsub.s32 %v608, %v610
        %v612 = vrot.slane %v584, %v611
        %v613 = vcombine.high %v591, %v591
        %v614 = vcombine.high %v598, %v598
        %v615 = vcombine.high %v605, %v605
        %v616 = vcombine.high %v612, %v612
        %v617 = vlaneseq
        %v618 = vshrl.u32 %v617, 7
        %v619 = vsub.s32 0, %v618
        %v620 = vrot.slane %v591, %v619
        %v621 = vlaneseq
        %v622 = vshrl.u32 %v621, 7
        %v623 = vsub.s32 0, %v622
        %v624 = vrot.slane %v605, %v623
        %v625 = vlaneseq
        %v626 = vshrl.u32 %v625, 7
        %v627 = vsub.s32 0, %v626
        %v628 = vrot.slane %v613, %v627
        %v629 = vlaneseq
        %v630 = vshrl.u32 %v629, 7
        %v631 = vsub.s32 0, %v630
        %v632 = vrot.slane %v615, %v631
        %v633 = vlaneseq
        %v634 = vshrl.u32 %v633, 7
        %v635 = vsub.s32 0, %v634
        %v636 = vrot.slane %v598, %v635
        %v637 = vlaneseq
        %v638 = vshrl.u32 %v637, 7
        %v639 = vsub.s32 0, %v638
        %v640 = vrot.slane %v612, %v639
        %v641 = vlaneseq
        %v642 = vshrl.u32 %v641, 7
        %v643 = vsub.s32 0, %v642
        %v644 = vrot.slane %v614, %v643
        %v645 = vlaneseq
        %v646 = vshrl.u32 %v645, 7
        %v647 = vsub.s32 0, %v646
        %v648 = vrot.slane %v616, %v647
        %658 = vset.pattern.permute.xlu0 0
        %659 = vperm.xlu0 %658, %v563
        %v660 = vpop.permute.xlu0 %659
        %663 = vset.pattern.permute.xlu0 0
        %664 = vperm.xlu0 %663, %v564
        %v665 = vpop.permute.xlu0 %664
        %668 = vset.pattern.permute.xlu0 0
        %669 = vperm.xlu0 %668, %v565
        %v670 = vpop.permute.xlu0 %669
        %673 = vset.pattern.permute.xlu0 0
        %674 = vperm.xlu0 %673, %v566
        %v675 = vpop.permute.xlu0 %674
        %v677 = vsub.f32 %v620, %v660
        %v678 = vsub.f32 %v620, %v665
        %v679 = vsub.f32 %v620, %v670
        %v680 = vsub.f32 %v620, %v675
        %v681 = vsub.f32 %v624, %v660
        %v682 = vsub.f32 %v624, %v665
        %v683 = vsub.f32 %v624, %v670
        %v684 = vsub.f32 %v624, %v675
        %v685 = vsub.f32 %v628, %v660
        %v686 = vsub.f32 %v628, %v665
        %v687 = vsub.f32 %v628, %v670
        %v688 = vsub.f32 %v628, %v675
        %v689 = vsub.f32 %v632, %v660
        %v690 = vsub.f32 %v632, %v665
        %v691 = vsub.f32 %v632, %v670
        %v692 = vsub.f32 %v632, %v675
        %v693 = vsub.f32 %v636, %v660
        %v694 = vsub.f32 %v636, %v665
        %v695 = vsub.f32 %v636, %v670
        %v696 = vsub.f32 %v636, %v675
        %v697 = vsub.f32 %v640, %v660
        %v698 = vsub.f32 %v640, %v665
        %v699 = vsub.f32 %v640, %v670
        %v700 = vsub.f32 %v640, %v675
        %v701 = vsub.f32 %v644, %v660
        %v702 = vsub.f32 %v644, %v665
        %v703 = vsub.f32 %v644, %v670
        %v704 = vsub.f32 %v644, %v675
        %v705 = vsub.f32 %v648, %v660
        %v706 = vsub.f32 %v648, %v665
        %v707 = vsub.f32 %v648, %v670
        %v708 = vsub.f32 %v648, %v675
        %v709 = vmul.f32 %v677, -4.0
        %v710 = vmul.f32 %v678, -4.0
        %v711 = vmul.f32 %v679, -4.0
        %v712 = vmul.f32 %v680, -4.0
        %v713 = vmul.f32 %v681, -4.0
        %v714 = vmul.f32 %v682, -4.0
        %v715 = vmul.f32 %v683, -4.0
        %v716 = vmul.f32 %v684, -4.0
        %v717 = vmul.f32 %v685, -4.0
        %v718 = vmul.f32 %v686, -4.0
        %v719 = vmul.f32 %v687, -4.0
        %v720 = vmul.f32 %v688, -4.0
        %v721 = vmul.f32 %v689, -4.0
        %v722 = vmul.f32 %v690, -4.0
        %v723 = vmul.f32 %v691, -4.0
        %v724 = vmul.f32 %v692, -4.0
        %v725 = vmul.f32 %v693, -4.0
        %v726 = vmul.f32 %v694, -4.0
        %v727 = vmul.f32 %v695, -4.0
        %v728 = vmul.f32 %v696, -4.0
        %v729 = vmul.f32 %v697, -4.0
        %v730 = vmul.f32 %v698, -4.0
        %v731 = vmul.f32 %v699, -4.0
        %v732 = vmul.f32 %v700, -4.0
        %v733 = vmul.f32 %v701, -4.0
        %v734 = vmul.f32 %v702, -4.0
        %v735 = vmul.f32 %v703, -4.0
        %v736 = vmul.f32 %v704, -4.0
        %v737 = vmul.f32 %v705, -4.0
        %v738 = vmul.f32 %v706, -4.0
        %v739 = vmul.f32 %v707, -4.0
        %v740 = vmul.f32 %v708, -4.0
        %v741 = vmul.f32 %v709, %v677
        %v742 = vmul.f32 %v710, %v678
        %v743 = vmul.f32 %v711, %v679
        %v744 = vmul.f32 %v712, %v680
        %v745 = vmul.f32 %v713, %v681
        %v746 = vmul.f32 %v714, %v682
        %v747 = vmul.f32 %v715, %v683
        %v748 = vmul.f32 %v716, %v684
        %v749 = vmul.f32 %v717, %v685
        %v750 = vmul.f32 %v718, %v686
        %v751 = vmul.f32 %v719, %v687
        %v752 = vmul.f32 %v720, %v688
        %v753 = vmul.f32 %v721, %v689
        %v754 = vmul.f32 %v722, %v690
        %v755 = vmul.f32 %v723, %v691
        %v756 = vmul.f32 %v724, %v692
        %v757 = vmul.f32 %v725, %v693
        %v758 = vmul.f32 %v726, %v694
        %v759 = vmul.f32 %v727, %v695
        %v760 = vmul.f32 %v728, %v696
        %v761 = vmul.f32 %v729, %v697
        %v762 = vmul.f32 %v730, %v698
        %v763 = vmul.f32 %v731, %v699
        %v764 = vmul.f32 %v732, %v700
        %v765 = vmul.f32 %v733, %v701
        %v766 = vmul.f32 %v734, %v702
        %v767 = vmul.f32 %v735, %v703
        %v768 = vmul.f32 %v736, %v704
        %v769 = vmul.f32 %v737, %v705
        %v770 = vmul.f32 %v738, %v706
        %v771 = vmul.f32 %v739, %v707
        %v772 = vmul.f32 %v740, %v708
        %v773 = vmul.f32 %v741, 1.442695
        %v774 = vpow.pop %v773
        %v775 = vmul.f32 %v742, 1.442695
        %v776 = vpow.pop %v775
        %v777 = vmul.f32 %v743, 1.442695
        %v778 = vpow.pop %v777
        %v779 = vmul.f32 %v744, 1.442695
        %v780 = vpow.pop %v779
        %v781 = vmul.f32 %v745, 1.442695
        %v782 = vpow.pop %v781
        %v783 = vmul.f32 %v746, 1.442695
        %v784 = vpow.pop %v783
        %v785 = vmul.f32 %v747, 1.442695
        %v786 = vpow.pop %v785
        %v787 = vmul.f32 %v748, 1.442695
        %v788 = vpow.pop %v787
        %v789 = vmul.f32 %v749, 1.442695
        %v790 = vpow.pop %v789
        %v791 = vmul.f32 %v750, 1.442695
        %v792 = vpow.pop %v791
        %v793 = vmul.f32 %v751, 1.442695
        %v794 = vpow.pop %v793
        %v795 = vmul.f32 %v752, 1.442695
        %v796 = vpow.pop %v795
        %v797 = vmul.f32 %v753, 1.442695
        %v798 = vpow.pop %v797
        %v799 = vmul.f32 %v754, 1.442695
        %v800 = vpow.pop %v799
        %v801 = vmul.f32 %v755, 1.442695
        %v802 = vpow.pop %v801
        %v803 = vmul.f32 %v756, 1.442695
        %v804 = vpow.pop %v803
        %v805 = vmul.f32 %v757, 1.442695
        %v806 = vpow.pop %v805
        %v807 = vmul.f32 %v758, 1.442695
        %v808 = vpow.pop %v807
        %v809 = vmul.f32 %v759, 1.442695
        %v810 = vpow.pop %v809
        %v811 = vmul.f32 %v760, 1.442695
        %v812 = vpow.pop %v811
        %v813 = vmul.f32 %v761, 1.442695
        %v814 = vpow.pop %v813
        %v815 = vmul.f32 %v762, 1.442695
        %v816 = vpow.pop %v815
        %v817 = vmul.f32 %v763, 1.442695
        %v818 = vpow.pop %v817
        %v819 = vmul.f32 %v764, 1.442695
        %v820 = vpow.pop %v819
        %v821 = vmul.f32 %v765, 1.442695
        %v822 = vpow.pop %v821
        %v823 = vmul.f32 %v766, 1.442695
        %v824 = vpow.pop %v823
        %v825 = vmul.f32 %v767, 1.442695
        %v826 = vpow.pop %v825
        %v827 = vmul.f32 %v768, 1.442695
        %v828 = vpow.pop %v827
        %v829 = vmul.f32 %v769, 1.442695
        %v830 = vpow.pop %v829
        %v831 = vmul.f32 %v770, 1.442695
        %v832 = vpow.pop %v831
        %v833 = vmul.f32 %v771, 1.442695
        %v834 = vpow.pop %v833
        %v835 = vmul.f32 %v772, 1.442695
        %v836 = vpow.pop %v835
        %v837 = vmul.f32 %v677, -8.0
        %v838 = vmul.f32 %v678, -8.0
        %v839 = vmul.f32 %v679, -8.0
        %v840 = vmul.f32 %v680, -8.0
        %v841 = vmul.f32 %v681, -8.0
        %v842 = vmul.f32 %v682, -8.0
        %v843 = vmul.f32 %v683, -8.0
        %v844 = vmul.f32 %v684, -8.0
        %v845 = vmul.f32 %v685, -8.0
        %v846 = vmul.f32 %v686, -8.0
        %v847 = vmul.f32 %v687, -8.0
        %v848 = vmul.f32 %v688, -8.0
        %v849 = vmul.f32 %v689, -8.0
        %v850 = vmul.f32 %v690, -8.0
        %v851 = vmul.f32 %v691, -8.0
        %v852 = vmul.f32 %v692, -8.0
        %v853 = vmul.f32 %v693, -8.0
        %v854 = vmul.f32 %v694, -8.0
        %v855 = vmul.f32 %v695, -8.0
        %v856 = vmul.f32 %v696, -8.0
        %v857 = vmul.f32 %v697, -8.0
        %v858 = vmul.f32 %v698, -8.0
        %v859 = vmul.f32 %v699, -8.0
        %v860 = vmul.f32 %v700, -8.0
        %v861 = vmul.f32 %v701, -8.0
        %v862 = vmul.f32 %v702, -8.0
        %v863 = vmul.f32 %v703, -8.0
        %v864 = vmul.f32 %v704, -8.0
        %v865 = vmul.f32 %v705, -8.0
        %v866 = vmul.f32 %v706, -8.0
        %v867 = vmul.f32 %v707, -8.0
        %v868 = vmul.f32 %v708, -8.0
        %v869 = vmul.f32 %v837, %v774
        %v870 = vmul.f32 %v838, %v776
        %v871 = vmul.f32 %v839, %v778
        %v872 = vmul.f32 %v840, %v780
        %v873 = vmul.f32 %v841, %v782
        %v874 = vmul.f32 %v842, %v784
        %v875 = vmul.f32 %v843, %v786
        %v876 = vmul.f32 %v844, %v788
        %v877 = vmul.f32 %v845, %v790
        %v878 = vmul.f32 %v846, %v792
        %v879 = vmul.f32 %v847, %v794
        %v880 = vmul.f32 %v848, %v796
        %v881 = vmul.f32 %v849, %v798
        %v882 = vmul.f32 %v850, %v800
        %v883 = vmul.f32 %v851, %v802
        %v884 = vmul.f32 %v852, %v804
        %v885 = vmul.f32 %v853, %v806
        %v886 = vmul.f32 %v854, %v808
        %v887 = vmul.f32 %v855, %v810
        %v888 = vmul.f32 %v856, %v812
        %v889 = vmul.f32 %v857, %v814
        %v890 = vmul.f32 %v858, %v816
        %v891 = vmul.f32 %v859, %v818
        %v892 = vmul.f32 %v860, %v820
        %v893 = vmul.f32 %v861, %v822
        %v894 = vmul.f32 %v862, %v824
        %v895 = vmul.f32 %v863, %v826
        %v896 = vmul.f32 %v864, %v828
        %v897 = vmul.f32 %v865, %v830
        %v898 = vmul.f32 %v866, %v832
        %v899 = vmul.f32 %v867, %v834
        %v900 = vmul.f32 %v868, %v836
        %v901 = vld [vmem:[%s6] sm:$0xf]
        %v902 = vld [vmem:[%s6 + $0x4] sm:$0xf]
        %v903 = vld [vmem:[%s6 + $0x8] sm:$0xf]
        %v904 = vld [vmem:[%s6 + $0xc] sm:$0xf]
        %v905 = vpack.c.bf16 %v776, %v774
        %v906 = vpack.c.bf16 %v780, %v778
        %v907 = vpack.c.bf16 %v784, %v782
        %v908 = vpack.c.bf16 %v788, %v786
        %v909 = vpack.c.bf16 %v792, %v790
        %v910 = vpack.c.bf16 %v796, %v794
        %v911 = vpack.c.bf16 %v800, %v798
        %v912 = vpack.c.bf16 %v804, %v802
        %v913 = vpack.c.bf16 %v808, %v806
        %v914 = vpack.c.bf16 %v812, %v810
        %v915 = vpack.c.bf16 %v816, %v814
        %v916 = vpack.c.bf16 %v820, %v818
        %v917 = vpack.c.bf16 %v824, %v822
        %v918 = vpack.c.bf16 %v828, %v826
        %v919 = vpack.c.bf16 %v832, %v830
        %v920 = vpack.c.bf16 %v836, %v834
        %921 = vset.pattern.permute.xlu0 1
        %922 = vperm.xlu0 %921, %v563
        %v923 = vpop.permute.xlu0 %922
        %925 = vset.pattern.permute.xlu0 1
        %926 = vperm.xlu0 %925, %v564
        %v927 = vpop.permute.xlu0 %926
        %929 = vset.pattern.permute.xlu0 1
        %930 = vperm.xlu0 %929, %v565
        %v931 = vpop.permute.xlu0 %930
        %933 = vset.pattern.permute.xlu0 1
        %934 = vperm.xlu0 %933, %v566
        %v935 = vpop.permute.xlu0 %934
        %v941 = vunpack.c.l.b16 %v901
        %v942 = vunpack.c.l.b16 %v902
        %v943 = vunpack.c.l.b16 %v903
        %v944 = vunpack.c.l.b16 %v904
        %v945 = vpack.c.b16 %v942, %v941
        %v946 = vpack.c.b16 %v944, %v943
        %vm947 = vcmask 261120
        %v949 = vsel %vm947, %v945, 0
        %v952 = vsel %vm947, %v946, 0
        %954 = vmatprep.subr.bf16.mxu0 0
        %955 = vmatpush1.bf16.msra.mxu0 0
        %956 = vmatprep.subr.bf16.mxu0 0
        %957 = vmatpush1.bf16.msra.mxu0 0
        %958 = vmatprep.subr.bf16.mxu0 0
        %959 = vmatpush1.bf16.msra.mxu0 0
        %960 = vmatprep.subr.bf16.mxu0 0
        %961 = vmatpush1.bf16.msra.mxu0 0
        %962 = vmatprep.subr.bf16.mxu0 0
        %963 = vmatpush1.bf16.msra.mxu0 0
        %964 = vmatprep.subr.bf16.mxu0 0
        %965 = vmatpush1.bf16.msra.mxu0 0
        %966 = vmatprep.subr.bf16.mxu0 0
        %967 = vmatpush1.bf16.msra.mxu0 %v906
        %968 = vmatprep.subr.bf16.mxu0 0
        %969 = vmatpush1.bf16.msra.mxu0 %v905
        %970 = vmatprep.subr.bf16.mxu0 0
        %971 = vmatpush2.bf16.msra.mxu0 0
        %972 = vmatprep.subr.bf16.mxu0 0
        %973 = vmatpush2.bf16.msra.mxu0 0
        %974 = vmatprep.subr.bf16.mxu0 0
        %975 = vmatpush2.bf16.msra.mxu0 0
        %976 = vmatprep.subr.bf16.mxu0 0
        %977 = vmatpush2.bf16.msra.mxu0 0
        %978 = vmatprep.subr.bf16.mxu0 0
        %979 = vmatpush2.bf16.msra.mxu0 0
        %980 = vmatprep.subr.bf16.mxu0 0
        %981 = vmatpush2.bf16.msra.mxu0 0
        %982 = vmatprep.subr.bf16.mxu0 0
        %983 = vmatpush2.bf16.msra.mxu0 0
        %984 = vmatprep.subr.bf16.mxu0 0
        %985 = vmatpush2.bf16.msra.mxu0 0
        %986 = vmatprep.mubr.bf16.mxu0 0
        %987 = vmatmul.mubr.bf16.gmra.mxu0 %v949
        %v988 = vpop.f32.mrf.mxu0
        %v989 = vadd.f32 %v923, %v988
        %v990 = vpop.f32.mrf.mxu0
        %v991 = vpop.f32.mrf.mxu0
        %v992 = vadd.f32 %v927, %v991
        %v993 = vpop.f32.mrf.mxu0
        %994 = vmatprep.mubr.bf16.mxu0 0
        %995 = vmatmul.mubr.bf16.gmra.mxu0 %v952
        %v996 = vpop.f32.mrf.mxu0
        %v997 = vadd.f32 %v931, %v996
        %v998 = vpop.f32.mrf.mxu0
        %v999 = vpop.f32.mrf.mxu0
        %v1000 = vadd.f32 %v935, %v999
        %v1001 = vpop.f32.mrf.mxu0
        %1002 = vdwg.mxu0
        %1003 = vmatprep.subr.bf16.mxu0 0
        %1004 = vmatpush1.bf16.msra.mxu0 0
        %1005 = vmatprep.subr.bf16.mxu0 0
        %1006 = vmatpush1.bf16.msra.mxu0 0
        %1007 = vmatprep.subr.bf16.mxu0 0
        %1008 = vmatpush1.bf16.msra.mxu0 0
        %1009 = vmatprep.subr.bf16.mxu0 0
        %1010 = vmatpush1.bf16.msra.mxu0 0
        %1011 = vmatprep.subr.bf16.mxu0 0
        %1012 = vmatpush1.bf16.msra.mxu0 0
        %1013 = vmatprep.subr.bf16.mxu0 0
        %1014 = vmatpush1.bf16.msra.mxu0 0
        %1015 = vmatprep.subr.bf16.mxu0 0
        %1016 = vmatpush1.bf16.msra.mxu0 %v908
        %1017 = vmatprep.subr.bf16.mxu0 0
        %1018 = vmatpush1.bf16.msra.mxu0 %v907
        %1019 = vmatprep.subr.bf16.mxu0 0
        %1020 = vmatpush2.bf16.msra.mxu0 0
        %1021 = vmatprep.subr.bf16.mxu0 0
        %1022 = vmatpush2.bf16.msra.mxu0 0
        %1023 = vmatprep.subr.bf16.mxu0 0
        %1024 = vmatpush2.bf16.msra.mxu0 0
        %1025 = vmatprep.subr.bf16.mxu0 0
        %1026 = vmatpush2.bf16.msra.mxu0 0
        %1027 = vmatprep.subr.bf16.mxu0 0
        %1028 = vmatpush2.bf16.msra.mxu0 0
        %1029 = vmatprep.subr.bf16.mxu0 0
        %1030 = vmatpush2.bf16.msra.mxu0 0
        %1031 = vmatprep.subr.bf16.mxu0 0
        %1032 = vmatpush2.bf16.msra.mxu0 0
        %1033 = vmatprep.subr.bf16.mxu0 0
        %1034 = vmatpush2.bf16.msra.mxu0 0
        %1035 = vmatprep.mubr.bf16.mxu0 0
        %1036 = vmatmul.mubr.bf16.gmra.mxu0 %v949
        %v1037 = vpop.f32.mrf.mxu0
        %v1038 = vadd.f32 %v923, %v1037
        %v1039 = vpop.f32.mrf.mxu0
        %v1040 = vpop.f32.mrf.mxu0
        %v1041 = vadd.f32 %v927, %v1040
        %v1042 = vpop.f32.mrf.mxu0
        %1043 = vmatprep.mubr.bf16.mxu0 0
        %1044 = vmatmul.mubr.bf16.gmra.mxu0 %v952
        %v1045 = vpop.f32.mrf.mxu0
        %v1046 = vadd.f32 %v931, %v1045
        %v1047 = vpop.f32.mrf.mxu0
        %v1048 = vpop.f32.mrf.mxu0
        %v1049 = vadd.f32 %v935, %v1048
        %v1050 = vpop.f32.mrf.mxu0
        %1051 = vdwg.mxu0
        %1052 = vmatprep.subr.bf16.mxu0 0
        %1053 = vmatpush1.bf16.msra.mxu0 0
        %1054 = vmatprep.subr.bf16.mxu0 0
        %1055 = vmatpush1.bf16.msra.mxu0 0
        %1056 = vmatprep.subr.bf16.mxu0 0
        %1057 = vmatpush1.bf16.msra.mxu0 0
        %1058 = vmatprep.subr.bf16.mxu0 0
        %1059 = vmatpush1.bf16.msra.mxu0 0
        %1060 = vmatprep.subr.bf16.mxu0 0
        %1061 = vmatpush1.bf16.msra.mxu0 0
        %1062 = vmatprep.subr.bf16.mxu0 0
        %1063 = vmatpush1.bf16.msra.mxu0 0
        %1064 = vmatprep.subr.bf16.mxu0 0
        %1065 = vmatpush1.bf16.msra.mxu0 %v910
        %1066 = vmatprep.subr.bf16.mxu0 0
        %1067 = vmatpush1.bf16.msra.mxu0 %v909
        %1068 = vmatprep.subr.bf16.mxu0 0
        %1069 = vmatpush2.bf16.msra.mxu0 0
        %1070 = vmatprep.subr.bf16.mxu0 0
        %1071 = vmatpush2.bf16.msra.mxu0 0
        %1072 = vmatprep.subr.bf16.mxu0 0
        %1073 = vmatpush2.bf16.msra.mxu0 0
        %1074 = vmatprep.subr.bf16.mxu0 0
        %1075 = vmatpush2.bf16.msra.mxu0 0
        %1076 = vmatprep.subr.bf16.mxu0 0
        %1077 = vmatpush2.bf16.msra.mxu0 0
        %1078 = vmatprep.subr.bf16.mxu0 0
        %1079 = vmatpush2.bf16.msra.mxu0 0
        %1080 = vmatprep.subr.bf16.mxu0 0
        %1081 = vmatpush2.bf16.msra.mxu0 0
        %1082 = vmatprep.subr.bf16.mxu0 0
        %1083 = vmatpush2.bf16.msra.mxu0 0
        %1084 = vmatprep.mubr.bf16.mxu0 0
        %1085 = vmatmul.mubr.bf16.gmra.mxu0 %v949
        %v1086 = vpop.f32.mrf.mxu0
        %v1087 = vadd.f32 %v923, %v1086
        %v1088 = vpop.f32.mrf.mxu0
        %v1089 = vpop.f32.mrf.mxu0
        %v1090 = vadd.f32 %v927, %v1089
        %v1091 = vpop.f32.mrf.mxu0
        %1092 = vmatprep.mubr.bf16.mxu0 0
        %1093 = vmatmul.mubr.bf16.gmra.mxu0 %v952
        %v1094 = vpop.f32.mrf.mxu0
        %v1095 = vadd.f32 %v931, %v1094
        %v1096 = vpop.f32.mrf.mxu0
        %v1097 = vpop.f32.mrf.mxu0
        %v1098 = vadd.f32 %v935, %v1097
        %v1099 = vpop.f32.mrf.mxu0
        %1100 = vdwg.mxu0
        %1101 = vmatprep.subr.bf16.mxu0 0
        %1102 = vmatpush1.bf16.msra.mxu0 0
        %1103 = vmatprep.subr.bf16.mxu0 0
        %1104 = vmatpush1.bf16.msra.mxu0 0
        %1105 = vmatprep.subr.bf16.mxu0 0
        %1106 = vmatpush1.bf16.msra.mxu0 0
        %1107 = vmatprep.subr.bf16.mxu0 0
        %1108 = vmatpush1.bf16.msra.mxu0 0
        %1109 = vmatprep.subr.bf16.mxu0 0
        %1110 = vmatpush1.bf16.msra.mxu0 0
        %1111 = vmatprep.subr.bf16.mxu0 0
        %1112 = vmatpush1.bf16.msra.mxu0 0
        %1113 = vmatprep.subr.bf16.mxu0 0
        %1114 = vmatpush1.bf16.msra.mxu0 %v912
        %1115 = vmatprep.subr.bf16.mxu0 0
        %1116 = vmatpush1.bf16.msra.mxu0 %v911
        %1117 = vmatprep.subr.bf16.mxu0 0
        %1118 = vmatpush2.bf16.msra.mxu0 0
        %1119 = vmatprep.subr.bf16.mxu0 0
        %1120 = vmatpush2.bf16.msra.mxu0 0
        %1121 = vmatprep.subr.bf16.mxu0 0
        %1122 = vmatpush2.bf16.msra.mxu0 0
        %1123 = vmatprep.subr.bf16.mxu0 0
        %1124 = vmatpush2.bf16.msra.mxu0 0
        %1125 = vmatprep.subr.bf16.mxu0 0
        %1126 = vmatpush2.bf16.msra.mxu0 0
        %1127 = vmatprep.subr.bf16.mxu0 0
        %1128 = vmatpush2.bf16.msra.mxu0 0
        %1129 = vmatprep.subr.bf16.mxu0 0
        %1130 = vmatpush2.bf16.msra.mxu0 0
        %1131 = vmatprep.subr.bf16.mxu0 0
        %1132 = vmatpush2.bf16.msra.mxu0 0
        %1133 = vmatprep.mubr.bf16.mxu0 0
        %1134 = vmatmul.mubr.bf16.gmra.mxu0 %v949
        %v1135 = vpop.f32.mrf.mxu0
        %v1136 = vadd.f32 %v923, %v1135
        %v1137 = vpop.f32.mrf.mxu0
        %v1138 = vpop.f32.mrf.mxu0
        %v1139 = vadd.f32 %v927, %v1138
        %v1140 = vpop.f32.mrf.mxu0
        %1141 = vmatprep.mubr.bf16.mxu0 0
        %1142 = vmatmul.mubr.bf16.gmra.mxu0 %v952
        %v1143 = vpop.f32.mrf.mxu0
        %v1144 = vadd.f32 %v931, %v1143
        %v1145 = vpop.f32.mrf.mxu0
        %v1146 = vpop.f32.mrf.mxu0
        %v1147 = vadd.f32 %v935, %v1146
        %v1148 = vpop.f32.mrf.mxu0
        %1149 = vdwg.mxu0
        %1150 = vmatprep.subr.bf16.mxu0 0
        %1151 = vmatpush1.bf16.msra.mxu0 0
        %1152 = vmatprep.subr.bf16.mxu0 0
        %1153 = vmatpush1.bf16.msra.mxu0 0
        %1154 = vmatprep.subr.bf16.mxu0 0
        %1155 = vmatpush1.bf16.msra.mxu0 0
        %1156 = vmatprep.subr.bf16.mxu0 0
        %1157 = vmatpush1.bf16.msra.mxu0 0
        %1158 = vmatprep.subr.bf16.mxu0 0
        %1159 = vmatpush1.bf16.msra.mxu0 0
        %1160 = vmatprep.subr.bf16.mxu0 0
        %1161 = vmatpush1.bf16.msra.mxu0 0
        %1162 = vmatprep.subr.bf16.mxu0 0
        %1163 = vmatpush1.bf16.msra.mxu0 %v914
        %1164 = vmatprep.subr.bf16.mxu0 0
        %1165 = vmatpush1.bf16.msra.mxu0 %v913
        %1166 = vmatprep.subr.bf16.mxu0 0
        %1167 = vmatpush2.bf16.msra.mxu0 0
        %1168 = vmatprep.subr.bf16.mxu0 0
        %1169 = vmatpush2.bf16.msra.mxu0 0
        %1170 = vmatprep.subr.bf16.mxu0 0
        %1171 = vmatpush2.bf16.msra.mxu0 0
        %1172 = vmatprep.subr.bf16.mxu0 0
        %1173 = vmatpush2.bf16.msra.mxu0 0
        %1174 = vmatprep.subr.bf16.mxu0 0
        %1175 = vmatpush2.bf16.msra.mxu0 0
        %1176 = vmatprep.subr.bf16.mxu0 0
        %1177 = vmatpush2.bf16.msra.mxu0 0
        %1178 = vmatprep.subr.bf16.mxu0 0
        %1179 = vmatpush2.bf16.msra.mxu0 0
        %1180 = vmatprep.subr.bf16.mxu0 0
        %1181 = vmatpush2.bf16.msra.mxu0 0
        %1182 = vmatprep.mubr.bf16.mxu0 0
        %1183 = vmatmul.mubr.bf16.gmra.mxu0 %v949
        %v1184 = vpop.f32.mrf.mxu0
        %v1185 = vadd.f32 %v923, %v1184
        %v1186 = vpop.f32.mrf.mxu0
        %v1187 = vpop.f32.mrf.mxu0
        %v1188 = vadd.f32 %v927, %v1187
        %v1189 = vpop.f32.mrf.mxu0
        %1190 = vmatprep.mubr.bf16.mxu0 0
        %1191 = vmatmul.mubr.bf16.gmra.mxu0 %v952
        %v1192 = vpop.f32.mrf.mxu0
        %v1193 = vadd.f32 %v931, %v1192
        %v1194 = vpop.f32.mrf.mxu0
        %v1195 = vpop.f32.mrf.mxu0
        %v1196 = vadd.f32 %v935, %v1195
        %v1197 = vpop.f32.mrf.mxu0
        %1198 = vdwg.mxu0
        %1199 = vmatprep.subr.bf16.mxu0 0
        %1200 = vmatpush1.bf16.msra.mxu0 0
        %1201 = vmatprep.subr.bf16.mxu0 0
        %1202 = vmatpush1.bf16.msra.mxu0 0
        %1203 = vmatprep.subr.bf16.mxu0 0
        %1204 = vmatpush1.bf16.msra.mxu0 0
        %1205 = vmatprep.subr.bf16.mxu0 0
        %1206 = vmatpush1.bf16.msra.mxu0 0
        %1207 = vmatprep.subr.bf16.mxu0 0
        %1208 = vmatpush1.bf16.msra.mxu0 0
        %1209 = vmatprep.subr.bf16.mxu0 0
        %1210 = vmatpush1.bf16.msra.mxu0 0
        %1211 = vmatprep.subr.bf16.mxu0 0
        %1212 = vmatpush1.bf16.msra.mxu0 %v916
        %1213 = vmatprep.subr.bf16.mxu0 0
        %1214 = vmatpush1.bf16.msra.mxu0 %v915
        %1215 = vmatprep.subr.bf16.mxu0 0
        %1216 = vmatpush2.bf16.msra.mxu0 0
        %1217 = vmatprep.subr.bf16.mxu0 0
        %1218 = vmatpush2.bf16.msra.mxu0 0
        %1219 = vmatprep.subr.bf16.mxu0 0
        %1220 = vmatpush2.bf16.msra.mxu0 0
        %1221 = vmatprep.subr.bf16.mxu0 0
        %1222 = vmatpush2.bf16.msra.mxu0 0
        %1223 = vmatprep.subr.bf16.mxu0 0
        %1224 = vmatpush2.bf16.msra.mxu0 0
        %1225 = vmatprep.subr.bf16.mxu0 0
        %1226 = vmatpush2.bf16.msra.mxu0 0
        %1227 = vmatprep.subr.bf16.mxu0 0
        %1228 = vmatpush2.bf16.msra.mxu0 0
        %1229 = vmatprep.subr.bf16.mxu0 0
        %1230 = vmatpush2.bf16.msra.mxu0 0
        %1231 = vmatprep.mubr.bf16.mxu0 0
        %1232 = vmatmul.mubr.bf16.gmra.mxu0 %v949
        %v1233 = vpop.f32.mrf.mxu0
        %v1234 = vadd.f32 %v923, %v1233
        %v1235 = vpop.f32.mrf.mxu0
        %v1236 = vpop.f32.mrf.mxu0
        %v1237 = vadd.f32 %v927, %v1236
        %v1238 = vpop.f32.mrf.mxu0
        %1239 = vmatprep.mubr.bf16.mxu0 0
        %1240 = vmatmul.mubr.bf16.gmra.mxu0 %v952
        %v1241 = vpop.f32.mrf.mxu0
        %v1242 = vadd.f32 %v931, %v1241
        %v1243 = vpop.f32.mrf.mxu0
        %v1244 = vpop.f32.mrf.mxu0
        %v1245 = vadd.f32 %v935, %v1244
        %v1246 = vpop.f32.mrf.mxu0
        %1247 = vdwg.mxu0
        %1248 = vmatprep.subr.bf16.mxu0 0
        %1249 = vmatpush1.bf16.msra.mxu0 0
        %1250 = vmatprep.subr.bf16.mxu0 0
        %1251 = vmatpush1.bf16.msra.mxu0 0
        %1252 = vmatprep.subr.bf16.mxu0 0
        %1253 = vmatpush1.bf16.msra.mxu0 0
        %1254 = vmatprep.subr.bf16.mxu0 0
        %1255 = vmatpush1.bf16.msra.mxu0 0
        %1256 = vmatprep.subr.bf16.mxu0 0
        %1257 = vmatpush1.bf16.msra.mxu0 0
        %1258 = vmatprep.subr.bf16.mxu0 0
        %1259 = vmatpush1.bf16.msra.mxu0 0
        %1260 = vmatprep.subr.bf16.mxu0 0
        %1261 = vmatpush1.bf16.msra.mxu0 %v918
        %1262 = vmatprep.subr.bf16.mxu0 0
        %1263 = vmatpush1.bf16.msra.mxu0 %v917
        %1264 = vmatprep.subr.bf16.mxu0 0
        %1265 = vmatpush2.bf16.msra.mxu0 0
        %1266 = vmatprep.subr.bf16.mxu0 0
        %1267 = vmatpush2.bf16.msra.mxu0 0
        %1268 = vmatprep.subr.bf16.mxu0 0
        %1269 = vmatpush2.bf16.msra.mxu0 0
        %1270 = vmatprep.subr.bf16.mxu0 0
        %1271 = vmatpush2.bf16.msra.mxu0 0
        %1272 = vmatprep.subr.bf16.mxu0 0
        %1273 = vmatpush2.bf16.msra.mxu0 0
        %1274 = vmatprep.subr.bf16.mxu0 0
        %1275 = vmatpush2.bf16.msra.mxu0 0
        %1276 = vmatprep.subr.bf16.mxu0 0
        %1277 = vmatpush2.bf16.msra.mxu0 0
        %1278 = vmatprep.subr.bf16.mxu0 0
        %1279 = vmatpush2.bf16.msra.mxu0 0
        %1280 = vmatprep.mubr.bf16.mxu0 0
        %1281 = vmatmul.mubr.bf16.gmra.mxu0 %v949
        %v1282 = vpop.f32.mrf.mxu0
        %v1283 = vadd.f32 %v923, %v1282
        %v1284 = vpop.f32.mrf.mxu0
        %v1285 = vpop.f32.mrf.mxu0
        %v1286 = vadd.f32 %v927, %v1285
        %v1287 = vpop.f32.mrf.mxu0
        %1288 = vmatprep.mubr.bf16.mxu0 0
        %1289 = vmatmul.mubr.bf16.gmra.mxu0 %v952
        %v1290 = vpop.f32.mrf.mxu0
        %v1291 = vadd.f32 %v931, %v1290
        %v1292 = vpop.f32.mrf.mxu0
        %v1293 = vpop.f32.mrf.mxu0
        %v1294 = vadd.f32 %v935, %v1293
        %v1295 = vpop.f32.mrf.mxu0
        %1296 = vdwg.mxu0
        %1297 = vmatprep.subr.bf16.mxu0 0
        %1298 = vmatpush1.bf16.msra.mxu0 0
        %1299 = vmatprep.subr.bf16.mxu0 0
        %1300 = vmatpush1.bf16.msra.mxu0 0
        %1301 = vmatprep.subr.bf16.mxu0 0
        %1302 = vmatpush1.bf16.msra.mxu0 0
        %1303 = vmatprep.subr.bf16.mxu0 0
        %1304 = vmatpush1.bf16.msra.mxu0 0
        %1305 = vmatprep.subr.bf16.mxu0 0
        %1306 = vmatpush1.bf16.msra.mxu0 0
        %1307 = vmatprep.subr.bf16.mxu0 0
        %1308 = vmatpush1.bf16.msra.mxu0 0
        %1309 = vmatprep.subr.bf16.mxu0 0
        %1310 = vmatpush1.bf16.msra.mxu0 %v920
        %1311 = vmatprep.subr.bf16.mxu0 0
        %1312 = vmatpush1.bf16.msra.mxu0 %v919
        %1313 = vmatprep.subr.bf16.mxu0 0
        %1314 = vmatpush2.bf16.msra.mxu0 0
        %1315 = vmatprep.subr.bf16.mxu0 0
        %1316 = vmatpush2.bf16.msra.mxu0 0
        %1317 = vmatprep.subr.bf16.mxu0 0
        %1318 = vmatpush2.bf16.msra.mxu0 0
        %1319 = vmatprep.subr.bf16.mxu0 0
        %1320 = vmatpush2.bf16.msra.mxu0 0
        %1321 = vmatprep.subr.bf16.mxu0 0
        %1322 = vmatpush2.bf16.msra.mxu0 0
        %1323 = vmatprep.subr.bf16.mxu0 0
        %1324 = vmatpush2.bf16.msra.mxu0 0
        %1325 = vmatprep.subr.bf16.mxu0 0
        %1326 = vmatpush2.bf16.msra.mxu0 0
        %1327 = vmatprep.subr.bf16.mxu0 0
        %1328 = vmatpush2.bf16.msra.mxu0 0
        %1329 = vmatprep.mubr.bf16.mxu0 0
        %1330 = vmatmul.mubr.bf16.gmra.mxu0 %v949
        %v1331 = vpop.f32.mrf.mxu0
        %v1332 = vadd.f32 %v923, %v1331
        %v1333 = vpop.f32.mrf.mxu0
        %v1334 = vpop.f32.mrf.mxu0
        %v1335 = vadd.f32 %v927, %v1334
        %v1336 = vpop.f32.mrf.mxu0
        %1337 = vmatprep.mubr.bf16.mxu0 0
        %1338 = vmatmul.mubr.bf16.gmra.mxu0 %v952
        %v1339 = vpop.f32.mrf.mxu0
        %v1340 = vadd.f32 %v931, %v1339
        %v1341 = vpop.f32.mrf.mxu0
        %v1342 = vpop.f32.mrf.mxu0
        %v1343 = vadd.f32 %v935, %v1342
        %v1344 = vpop.f32.mrf.mxu0
        %1345 = vdwg.mxu0
        %v1346 = vpack.c.bf16 %v870, %v869
        %v1347 = vpack.c.bf16 %v872, %v871
        %v1348 = vpack.c.bf16 %v874, %v873
        %v1349 = vpack.c.bf16 %v876, %v875
        %v1350 = vpack.c.bf16 %v878, %v877
        %v1351 = vpack.c.bf16 %v880, %v879
        %v1352 = vpack.c.bf16 %v882, %v881
        %v1353 = vpack.c.bf16 %v884, %v883
        %v1354 = vpack.c.bf16 %v886, %v885
        %v1355 = vpack.c.bf16 %v888, %v887
        %v1356 = vpack.c.bf16 %v890, %v889
        %v1357 = vpack.c.bf16 %v892, %v891
        %v1358 = vpack.c.bf16 %v894, %v893
        %v1359 = vpack.c.bf16 %v896, %v895
        %v1360 = vpack.c.bf16 %v898, %v897
        %v1361 = vpack.c.bf16 %v900, %v899
        %1362 = vmatprep.subr.bf16.mxu0 0
        %1363 = vmatpush1.bf16.msra.mxu0 0
        %1364 = vmatprep.subr.bf16.mxu0 0
        %1365 = vmatpush1.bf16.msra.mxu0 0
        %1366 = vmatprep.subr.bf16.mxu0 0
        %1367 = vmatpush1.bf16.msra.mxu0 0
        %1368 = vmatprep.subr.bf16.mxu0 0
        %1369 = vmatpush1.bf16.msra.mxu0 0
        %1370 = vmatprep.subr.bf16.mxu0 0
        %1371 = vmatpush1.bf16.msra.mxu0 0
        %1372 = vmatprep.subr.bf16.mxu0 0
        %1373 = vmatpush1.bf16.msra.mxu0 0
        %1374 = vmatprep.subr.bf16.mxu0 0
        %1375 = vmatpush1.bf16.msra.mxu0 %v1347
        %1376 = vmatprep.subr.bf16.mxu0 0
        %1377 = vmatpush1.bf16.msra.mxu0 %v1346
        %1378 = vmatprep.subr.bf16.mxu0 0
        %1379 = vmatpush2.bf16.msra.mxu0 0
        %1380 = vmatprep.subr.bf16.mxu0 0
        %1381 = vmatpush2.bf16.msra.mxu0 0
        %1382 = vmatprep.subr.bf16.mxu0 0
        %1383 = vmatpush2.bf16.msra.mxu0 0
        %1384 = vmatprep.subr.bf16.mxu0 0
        %1385 = vmatpush2.bf16.msra.mxu0 0
        %1386 = vmatprep.subr.bf16.mxu0 0
        %1387 = vmatpush2.bf16.msra.mxu0 0
        %1388 = vmatprep.subr.bf16.mxu0 0
        %1389 = vmatpush2.bf16.msra.mxu0 0
        %1390 = vmatprep.subr.bf16.mxu0 0
        %1391 = vmatpush2.bf16.msra.mxu0 0
        %1392 = vmatprep.subr.bf16.mxu0 0
        %1393 = vmatpush2.bf16.msra.mxu0 0
        %1394 = vmatprep.mubr.bf16.mxu0 0
        %1395 = vmatmul.mubr.bf16.gmra.mxu0 %v949
        %v1396 = vpop.f32.mrf.mxu0
        %v1397 = vadd.f32 0.0, %v1396
        %v1398 = vpop.f32.mrf.mxu0
        %v1399 = vpop.f32.mrf.mxu0
        %v1400 = vadd.f32 0.0, %v1399
        %v1401 = vpop.f32.mrf.mxu0
        %1402 = vmatprep.mubr.bf16.mxu0 0
        %1403 = vmatmul.mubr.bf16.gmra.mxu0 %v952
        %v1404 = vpop.f32.mrf.mxu0
        %v1405 = vadd.f32 0.0, %v1404
        %v1406 = vpop.f32.mrf.mxu0
        %v1407 = vpop.f32.mrf.mxu0
        %v1408 = vadd.f32 0.0, %v1407
        %v1409 = vpop.f32.mrf.mxu0
        %1410 = vdwg.mxu0
        %1411 = vmatprep.subr.bf16.mxu0 0
        %1412 = vmatpush1.bf16.msra.mxu0 0
        %1413 = vmatprep.subr.bf16.mxu0 0
        %1414 = vmatpush1.bf16.msra.mxu0 0
        %1415 = vmatprep.subr.bf16.mxu0 0
        %1416 = vmatpush1.bf16.msra.mxu0 0
        %1417 = vmatprep.subr.bf16.mxu0 0
        %1418 = vmatpush1.bf16.msra.mxu0 0
        %1419 = vmatprep.subr.bf16.mxu0 0
        %1420 = vmatpush1.bf16.msra.mxu0 0
        %1421 = vmatprep.subr.bf16.mxu0 0
        %1422 = vmatpush1.bf16.msra.mxu0 0
        %1423 = vmatprep.subr.bf16.mxu0 0
        %1424 = vmatpush1.bf16.msra.mxu0 %v1349
        %1425 = vmatprep.subr.bf16.mxu0 0
        %1426 = vmatpush1.bf16.msra.mxu0 %v1348
        %1427 = vmatprep.subr.bf16.mxu0 0
        %1428 = vmatpush2.bf16.msra.mxu0 0
        %1429 = vmatprep.subr.bf16.mxu0 0
        %1430 = vmatpush2.bf16.msra.mxu0 0
        %1431 = vmatprep.subr.bf16.mxu0 0
        %1432 = vmatpush2.bf16.msra.mxu0 0
        %1433 = vmatprep.subr.bf16.mxu0 0
        %1434 = vmatpush2.bf16.msra.mxu0 0
        %1435 = vmatprep.subr.bf16.mxu0 0
        %1436 = vmatpush2.bf16.msra.mxu0 0
        %1437 = vmatprep.subr.bf16.mxu0 0
        %1438 = vmatpush2.bf16.msra.mxu0 0
        %1439 = vmatprep.subr.bf16.mxu0 0
        %1440 = vmatpush2.bf16.msra.mxu0 0
        %1441 = vmatprep.subr.bf16.mxu0 0
        %1442 = vmatpush2.bf16.msra.mxu0 0
        %1443 = vmatprep.mubr.bf16.mxu0 0
        %1444 = vmatmul.mubr.bf16.gmra.mxu0 %v949
        %v1445 = vpop.f32.mrf.mxu0
        %v1446 = vadd.f32 0.0, %v1445
        %v1447 = vpop.f32.mrf.mxu0
        %v1448 = vpop.f32.mrf.mxu0
        %v1449 = vadd.f32 0.0, %v1448
        %v1450 = vpop.f32.mrf.mxu0
        %1451 = vmatprep.mubr.bf16.mxu0 0
        %1452 = vmatmul.mubr.bf16.gmra.mxu0 %v952
        %v1453 = vpop.f32.mrf.mxu0
        %v1454 = vadd.f32 0.0, %v1453
        %v1455 = vpop.f32.mrf.mxu0
        %v1456 = vpop.f32.mrf.mxu0
        %v1457 = vadd.f32 0.0, %v1456
        %v1458 = vpop.f32.mrf.mxu0
        %1459 = vdwg.mxu0
        %1460 = vmatprep.subr.bf16.mxu0 0
        %1461 = vmatpush1.bf16.msra.mxu0 0
        %1462 = vmatprep.subr.bf16.mxu0 0
        %1463 = vmatpush1.bf16.msra.mxu0 0
        %1464 = vmatprep.subr.bf16.mxu0 0
        %1465 = vmatpush1.bf16.msra.mxu0 0
        %1466 = vmatprep.subr.bf16.mxu0 0
        %1467 = vmatpush1.bf16.msra.mxu0 0
        %1468 = vmatprep.subr.bf16.mxu0 0
        %1469 = vmatpush1.bf16.msra.mxu0 0
        %1470 = vmatprep.subr.bf16.mxu0 0
        %1471 = vmatpush1.bf16.msra.mxu0 0
        %1472 = vmatprep.subr.bf16.mxu0 0
        %1473 = vmatpush1.bf16.msra.mxu0 %v1351
        %1474 = vmatprep.subr.bf16.mxu0 0
        %1475 = vmatpush1.bf16.msra.mxu0 %v1350
        %1476 = vmatprep.subr.bf16.mxu0 0
        %1477 = vmatpush2.bf16.msra.mxu0 0
        %1478 = vmatprep.subr.bf16.mxu0 0
        %1479 = vmatpush2.bf16.msra.mxu0 0
        %1480 = vmatprep.subr.bf16.mxu0 0
        %1481 = vmatpush2.bf16.msra.mxu0 0
        %1482 = vmatprep.subr.bf16.mxu0 0
        %1483 = vmatpush2.bf16.msra.mxu0 0
        %1484 = vmatprep.subr.bf16.mxu0 0
        %1485 = vmatpush2.bf16.msra.mxu0 0
        %1486 = vmatprep.subr.bf16.mxu0 0
        %1487 = vmatpush2.bf16.msra.mxu0 0
        %1488 = vmatprep.subr.bf16.mxu0 0
        %1489 = vmatpush2.bf16.msra.mxu0 0
        %1490 = vmatprep.subr.bf16.mxu0 0
        %1491 = vmatpush2.bf16.msra.mxu0 0
        %1492 = vmatprep.mubr.bf16.mxu0 0
        %1493 = vmatmul.mubr.bf16.gmra.mxu0 %v949
        %v1494 = vpop.f32.mrf.mxu0
        %v1495 = vadd.f32 0.0, %v1494
        %v1496 = vpop.f32.mrf.mxu0
        %v1497 = vpop.f32.mrf.mxu0
        %v1498 = vadd.f32 0.0, %v1497
        %v1499 = vpop.f32.mrf.mxu0
        %1500 = vmatprep.mubr.bf16.mxu0 0
        %1501 = vmatmul.mubr.bf16.gmra.mxu0 %v952
        %v1502 = vpop.f32.mrf.mxu0
        %v1503 = vadd.f32 0.0, %v1502
        %v1504 = vpop.f32.mrf.mxu0
        %v1505 = vpop.f32.mrf.mxu0
        %v1506 = vadd.f32 0.0, %v1505
        %v1507 = vpop.f32.mrf.mxu0
        %1508 = vdwg.mxu0
        %1509 = vmatprep.subr.bf16.mxu0 0
        %1510 = vmatpush1.bf16.msra.mxu0 0
        %1511 = vmatprep.subr.bf16.mxu0 0
        %1512 = vmatpush1.bf16.msra.mxu0 0
        %1513 = vmatprep.subr.bf16.mxu0 0
        %1514 = vmatpush1.bf16.msra.mxu0 0
        %1515 = vmatprep.subr.bf16.mxu0 0
        %1516 = vmatpush1.bf16.msra.mxu0 0
        %1517 = vmatprep.subr.bf16.mxu0 0
        %1518 = vmatpush1.bf16.msra.mxu0 0
        %1519 = vmatprep.subr.bf16.mxu0 0
        %1520 = vmatpush1.bf16.msra.mxu0 0
        %1521 = vmatprep.subr.bf16.mxu0 0
        %1522 = vmatpush1.bf16.msra.mxu0 %v1353
        %1523 = vmatprep.subr.bf16.mxu0 0
        %1524 = vmatpush1.bf16.msra.mxu0 %v1352
        %1525 = vmatprep.subr.bf16.mxu0 0
        %1526 = vmatpush2.bf16.msra.mxu0 0
        %1527 = vmatprep.subr.bf16.mxu0 0
        %1528 = vmatpush2.bf16.msra.mxu0 0
        %1529 = vmatprep.subr.bf16.mxu0 0
        %1530 = vmatpush2.bf16.msra.mxu0 0
        %1531 = vmatprep.subr.bf16.mxu0 0
        %1532 = vmatpush2.bf16.msra.mxu0 0
        %1533 = vmatprep.subr.bf16.mxu0 0
        %1534 = vmatpush2.bf16.msra.mxu0 0
        %1535 = vmatprep.subr.bf16.mxu0 0
        %1536 = vmatpush2.bf16.msra.mxu0 0
        %1537 = vmatprep.subr.bf16.mxu0 0
        %1538 = vmatpush2.bf16.msra.mxu0 0
        %1539 = vmatprep.subr.bf16.mxu0 0
        %1540 = vmatpush2.bf16.msra.mxu0 0
        %1541 = vmatprep.mubr.bf16.mxu0 0
        %1542 = vmatmul.mubr.bf16.gmra.mxu0 %v949
        %v1543 = vpop.f32.mrf.mxu0
        %v1544 = vadd.f32 0.0, %v1543
        %v1545 = vpop.f32.mrf.mxu0
        %v1546 = vpop.f32.mrf.mxu0
        %v1547 = vadd.f32 0.0, %v1546
        %v1548 = vpop.f32.mrf.mxu0
        %1549 = vmatprep.mubr.bf16.mxu0 0
        %1550 = vmatmul.mubr.bf16.gmra.mxu0 %v952
        %v1551 = vpop.f32.mrf.mxu0
        %v1552 = vadd.f32 0.0, %v1551
        %v1553 = vpop.f32.mrf.mxu0
        %v1554 = vpop.f32.mrf.mxu0
        %v1555 = vadd.f32 0.0, %v1554
        %v1556 = vpop.f32.mrf.mxu0
        %1557 = vdwg.mxu0
        %1558 = vmatprep.subr.bf16.mxu0 0
        %1559 = vmatpush1.bf16.msra.mxu0 0
        %1560 = vmatprep.subr.bf16.mxu0 0
        %1561 = vmatpush1.bf16.msra.mxu0 0
        %1562 = vmatprep.subr.bf16.mxu0 0
        %1563 = vmatpush1.bf16.msra.mxu0 0
        %1564 = vmatprep.subr.bf16.mxu0 0
        %1565 = vmatpush1.bf16.msra.mxu0 0
        %1566 = vmatprep.subr.bf16.mxu0 0
        %1567 = vmatpush1.bf16.msra.mxu0 0
        %1568 = vmatprep.subr.bf16.mxu0 0
        %1569 = vmatpush1.bf16.msra.mxu0 0
        %1570 = vmatprep.subr.bf16.mxu0 0
        %1571 = vmatpush1.bf16.msra.mxu0 %v1355
        %1572 = vmatprep.subr.bf16.mxu0 0
        %1573 = vmatpush1.bf16.msra.mxu0 %v1354
        %1574 = vmatprep.subr.bf16.mxu0 0
        %1575 = vmatpush2.bf16.msra.mxu0 0
        %1576 = vmatprep.subr.bf16.mxu0 0
        %1577 = vmatpush2.bf16.msra.mxu0 0
        %1578 = vmatprep.subr.bf16.mxu0 0
        %1579 = vmatpush2.bf16.msra.mxu0 0
        %1580 = vmatprep.subr.bf16.mxu0 0
        %1581 = vmatpush2.bf16.msra.mxu0 0
        %1582 = vmatprep.subr.bf16.mxu0 0
        %1583 = vmatpush2.bf16.msra.mxu0 0
        %1584 = vmatprep.subr.bf16.mxu0 0
        %1585 = vmatpush2.bf16.msra.mxu0 0
        %1586 = vmatprep.subr.bf16.mxu0 0
        %1587 = vmatpush2.bf16.msra.mxu0 0
        %1588 = vmatprep.subr.bf16.mxu0 0
        %1589 = vmatpush2.bf16.msra.mxu0 0
        %1590 = vmatprep.mubr.bf16.mxu0 0
        %1591 = vmatmul.mubr.bf16.gmra.mxu0 %v949
        %v1592 = vpop.f32.mrf.mxu0
        %v1593 = vadd.f32 0.0, %v1592
        %v1594 = vpop.f32.mrf.mxu0
        %v1595 = vpop.f32.mrf.mxu0
        %v1596 = vadd.f32 0.0, %v1595
        %v1597 = vpop.f32.mrf.mxu0
        %1598 = vmatprep.mubr.bf16.mxu0 0
        %1599 = vmatmul.mubr.bf16.gmra.mxu0 %v952
        %v1600 = vpop.f32.mrf.mxu0
        %v1601 = vadd.f32 0.0, %v1600
        %v1602 = vpop.f32.mrf.mxu0
        %v1603 = vpop.f32.mrf.mxu0
        %v1604 = vadd.f32 0.0, %v1603
        %v1605 = vpop.f32.mrf.mxu0
        %1606 = vdwg.mxu0
        %1607 = vmatprep.subr.bf16.mxu0 0
        %1608 = vmatpush1.bf16.msra.mxu0 0
        %1609 = vmatprep.subr.bf16.mxu0 0
        %1610 = vmatpush1.bf16.msra.mxu0 0
        %1611 = vmatprep.subr.bf16.mxu0 0
        %1612 = vmatpush1.bf16.msra.mxu0 0
        %1613 = vmatprep.subr.bf16.mxu0 0
        %1614 = vmatpush1.bf16.msra.mxu0 0
        %1615 = vmatprep.subr.bf16.mxu0 0
        %1616 = vmatpush1.bf16.msra.mxu0 0
        %1617 = vmatprep.subr.bf16.mxu0 0
        %1618 = vmatpush1.bf16.msra.mxu0 0
        %1619 = vmatprep.subr.bf16.mxu0 0
        %1620 = vmatpush1.bf16.msra.mxu0 %v1357
        %1621 = vmatprep.subr.bf16.mxu0 0
        %1622 = vmatpush1.bf16.msra.mxu0 %v1356
        %1623 = vmatprep.subr.bf16.mxu0 0
        %1624 = vmatpush2.bf16.msra.mxu0 0
        %1625 = vmatprep.subr.bf16.mxu0 0
        %1626 = vmatpush2.bf16.msra.mxu0 0
        %1627 = vmatprep.subr.bf16.mxu0 0
        %1628 = vmatpush2.bf16.msra.mxu0 0
        %1629 = vmatprep.subr.bf16.mxu0 0
        %1630 = vmatpush2.bf16.msra.mxu0 0
        %1631 = vmatprep.subr.bf16.mxu0 0
        %1632 = vmatpush2.bf16.msra.mxu0 0
        %1633 = vmatprep.subr.bf16.mxu0 0
        %1634 = vmatpush2.bf16.msra.mxu0 0
        %1635 = vmatprep.subr.bf16.mxu0 0
        %1636 = vmatpush2.bf16.msra.mxu0 0
        %1637 = vmatprep.subr.bf16.mxu0 0
        %1638 = vmatpush2.bf16.msra.mxu0 0
        %1639 = vmatprep.mubr.bf16.mxu0 0
        %1640 = vmatmul.mubr.bf16.gmra.mxu0 %v949
        %v1641 = vpop.f32.mrf.mxu0
        %v1642 = vadd.f32 0.0, %v1641
        %v1643 = vpop.f32.mrf.mxu0
        %v1644 = vpop.f32.mrf.mxu0
        %v1645 = vadd.f32 0.0, %v1644
        %v1646 = vpop.f32.mrf.mxu0
        %1647 = vmatprep.mubr.bf16.mxu0 0
        %1648 = vmatmul.mubr.bf16.gmra.mxu0 %v952
        %v1649 = vpop.f32.mrf.mxu0
        %v1650 = vadd.f32 0.0, %v1649
        %v1651 = vpop.f32.mrf.mxu0
        %v1652 = vpop.f32.mrf.mxu0
        %v1653 = vadd.f32 0.0, %v1652
        %v1654 = vpop.f32.mrf.mxu0
        %1655 = vdwg.mxu0
        %1656 = vmatprep.subr.bf16.mxu0 0
        %1657 = vmatpush1.bf16.msra.mxu0 0
        %1658 = vmatprep.subr.bf16.mxu0 0
        %1659 = vmatpush1.bf16.msra.mxu0 0
        %1660 = vmatprep.subr.bf16.mxu0 0
        %1661 = vmatpush1.bf16.msra.mxu0 0
        %1662 = vmatprep.subr.bf16.mxu0 0
        %1663 = vmatpush1.bf16.msra.mxu0 0
        %1664 = vmatprep.subr.bf16.mxu0 0
        %1665 = vmatpush1.bf16.msra.mxu0 0
        %1666 = vmatprep.subr.bf16.mxu0 0
        %1667 = vmatpush1.bf16.msra.mxu0 0
        %1668 = vmatprep.subr.bf16.mxu0 0
        %1669 = vmatpush1.bf16.msra.mxu0 %v1359
        %1670 = vmatprep.subr.bf16.mxu0 0
        %1671 = vmatpush1.bf16.msra.mxu0 %v1358
        %1672 = vmatprep.subr.bf16.mxu0 0
        %1673 = vmatpush2.bf16.msra.mxu0 0
        %1674 = vmatprep.subr.bf16.mxu0 0
        %1675 = vmatpush2.bf16.msra.mxu0 0
        %1676 = vmatprep.subr.bf16.mxu0 0
        %1677 = vmatpush2.bf16.msra.mxu0 0
        %1678 = vmatprep.subr.bf16.mxu0 0
        %1679 = vmatpush2.bf16.msra.mxu0 0
        %1680 = vmatprep.subr.bf16.mxu0 0
        %1681 = vmatpush2.bf16.msra.mxu0 0
        %1682 = vmatprep.subr.bf16.mxu0 0
        %1683 = vmatpush2.bf16.msra.mxu0 0
        %1684 = vmatprep.subr.bf16.mxu0 0
        %1685 = vmatpush2.bf16.msra.mxu0 0
        %1686 = vmatprep.subr.bf16.mxu0 0
        %1687 = vmatpush2.bf16.msra.mxu0 0
        %1688 = vmatprep.mubr.bf16.mxu0 0
        %1689 = vmatmul.mubr.bf16.gmra.mxu0 %v949
        %v1690 = vpop.f32.mrf.mxu0
        %v1691 = vadd.f32 0.0, %v1690
        %v1692 = vpop.f32.mrf.mxu0
        %v1693 = vpop.f32.mrf.mxu0
        %v1694 = vadd.f32 0.0, %v1693
        %v1695 = vpop.f32.mrf.mxu0
        %1696 = vmatprep.mubr.bf16.mxu0 0
        %1697 = vmatmul.mubr.bf16.gmra.mxu0 %v952
        %v1698 = vpop.f32.mrf.mxu0
        %v1699 = vadd.f32 0.0, %v1698
        %v1700 = vpop.f32.mrf.mxu0
        %v1701 = vpop.f32.mrf.mxu0
        %v1702 = vadd.f32 0.0, %v1701
        %v1703 = vpop.f32.mrf.mxu0
        %1704 = vdwg.mxu0
        %1705 = vmatprep.subr.bf16.mxu0 0
        %1706 = vmatpush1.bf16.msra.mxu0 0
        %1707 = vmatprep.subr.bf16.mxu0 0
        %1708 = vmatpush1.bf16.msra.mxu0 0
        %1709 = vmatprep.subr.bf16.mxu0 0
        %1710 = vmatpush1.bf16.msra.mxu0 0
        %1711 = vmatprep.subr.bf16.mxu0 0
        %1712 = vmatpush1.bf16.msra.mxu0 0
        %1713 = vmatprep.subr.bf16.mxu0 0
        %1714 = vmatpush1.bf16.msra.mxu0 0
        %1715 = vmatprep.subr.bf16.mxu0 0
        %1716 = vmatpush1.bf16.msra.mxu0 0
        %1717 = vmatprep.subr.bf16.mxu0 0
        %1718 = vmatpush1.bf16.msra.mxu0 %v1361
        %1719 = vmatprep.subr.bf16.mxu0 0
        %1720 = vmatpush1.bf16.msra.mxu0 %v1360
        %1721 = vmatprep.subr.bf16.mxu0 0
        %1722 = vmatpush2.bf16.msra.mxu0 0
        %1723 = vmatprep.subr.bf16.mxu0 0
        %1724 = vmatpush2.bf16.msra.mxu0 0
        %1725 = vmatprep.subr.bf16.mxu0 0
        %1726 = vmatpush2.bf16.msra.mxu0 0
        %1727 = vmatprep.subr.bf16.mxu0 0
        %1728 = vmatpush2.bf16.msra.mxu0 0
        %1729 = vmatprep.subr.bf16.mxu0 0
        %1730 = vmatpush2.bf16.msra.mxu0 0
        %1731 = vmatprep.subr.bf16.mxu0 0
        %1732 = vmatpush2.bf16.msra.mxu0 0
        %1733 = vmatprep.subr.bf16.mxu0 0
        %1734 = vmatpush2.bf16.msra.mxu0 0
        %1735 = vmatprep.subr.bf16.mxu0 0
        %1736 = vmatpush2.bf16.msra.mxu0 0
        %1737 = vmatprep.mubr.bf16.mxu0 0
        %1738 = vmatmul.mubr.bf16.gmra.mxu0 %v949
        %v1739 = vpop.f32.mrf.mxu0
        %v1740 = vadd.f32 0.0, %v1739
        %v1741 = vpop.f32.mrf.mxu0
        %v1742 = vpop.f32.mrf.mxu0
        %v1743 = vadd.f32 0.0, %v1742
        %v1744 = vpop.f32.mrf.mxu0
        %1745 = vmatprep.mubr.bf16.mxu0 0
        %1746 = vmatmul.mubr.bf16.gmra.mxu0 %v952
        %v1747 = vpop.f32.mrf.mxu0
        %v1748 = vadd.f32 0.0, %v1747
        %v1749 = vpop.f32.mrf.mxu0
        %v1750 = vpop.f32.mrf.mxu0
        %v1751 = vadd.f32 0.0, %v1750
        %v1752 = vpop.f32.mrf.mxu0
        %1753 = vdwg.mxu0
        %v1754 = vtanh.pop %v989
        %v1755 = vtanh.pop %v992
        %v1756 = vtanh.pop %v997
        %v1757 = vtanh.pop %v1000
        %v1758 = vtanh.pop %v1038
        %v1759 = vtanh.pop %v1041
        %v1760 = vtanh.pop %v1046
        %v1761 = vtanh.pop %v1049
        %v1762 = vtanh.pop %v1087
        %v1763 = vtanh.pop %v1090
        %v1764 = vtanh.pop %v1095
        %v1765 = vtanh.pop %v1098
        %v1766 = vtanh.pop %v1136
        %v1767 = vtanh.pop %v1139
        %v1768 = vtanh.pop %v1144
        %v1769 = vtanh.pop %v1147
        %v1770 = vtanh.pop %v1185
        %v1771 = vtanh.pop %v1188
        %v1772 = vtanh.pop %v1193
        %v1773 = vtanh.pop %v1196
        %v1774 = vtanh.pop %v1234
        %v1775 = vtanh.pop %v1237
        %v1776 = vtanh.pop %v1242
        %v1777 = vtanh.pop %v1245
        %v1778 = vtanh.pop %v1283
        %v1779 = vtanh.pop %v1286
        %v1780 = vtanh.pop %v1291
        %v1781 = vtanh.pop %v1294
        %v1782 = vtanh.pop %v1332
        %v1783 = vtanh.pop %v1335
        %v1784 = vtanh.pop %v1340
        %v1785 = vtanh.pop %v1343
        %1786 = vset.pattern.permute.xlu0 2
        %1787 = vperm.xlu0 %1786, %v563
        %v1788 = vpop.permute.xlu0 %1787
        %1790 = vset.pattern.permute.xlu0 2
        %1791 = vperm.xlu0 %1790, %v564
        %v1792 = vpop.permute.xlu0 %1791
        %1794 = vset.pattern.permute.xlu0 2
        %1795 = vperm.xlu0 %1794, %v565
        %v1796 = vpop.permute.xlu0 %1795
        %1798 = vset.pattern.permute.xlu0 2
        %1799 = vperm.xlu0 %1798, %v566
        %v1800 = vpop.permute.xlu0 %1799
        %v1802 = vmul.f32 %v1754, %v1788
        %v1803 = vmul.f32 %v1755, %v1792
        %v1804 = vmul.f32 %v1756, %v1796
        %v1805 = vmul.f32 %v1757, %v1800
        %v1806 = vmul.f32 %v1758, %v1788
        %v1807 = vmul.f32 %v1759, %v1792
        %v1808 = vmul.f32 %v1760, %v1796
        %v1809 = vmul.f32 %v1761, %v1800
        %v1810 = vmul.f32 %v1762, %v1788
        %v1811 = vmul.f32 %v1763, %v1792
        %v1812 = vmul.f32 %v1764, %v1796
        %v1813 = vmul.f32 %v1765, %v1800
        %v1814 = vmul.f32 %v1766, %v1788
        %v1815 = vmul.f32 %v1767, %v1792
        %v1816 = vmul.f32 %v1768, %v1796
        %v1817 = vmul.f32 %v1769, %v1800
        %v1818 = vmul.f32 %v1770, %v1788
        %v1819 = vmul.f32 %v1771, %v1792
        %v1820 = vmul.f32 %v1772, %v1796
        %v1821 = vmul.f32 %v1773, %v1800
        %v1822 = vmul.f32 %v1774, %v1788
        %v1823 = vmul.f32 %v1775, %v1792
        %v1824 = vmul.f32 %v1776, %v1796
        %v1825 = vmul.f32 %v1777, %v1800
        %v1826 = vmul.f32 %v1778, %v1788
        %v1827 = vmul.f32 %v1779, %v1792
        %v1828 = vmul.f32 %v1780, %v1796
        %v1829 = vmul.f32 %v1781, %v1800
        %v1830 = vmul.f32 %v1782, %v1788
        %v1831 = vmul.f32 %v1783, %v1792
        %v1832 = vmul.f32 %v1784, %v1796
        %v1833 = vmul.f32 %v1785, %v1800
        %v1834 = vsel %vm486, %v1802, 0.0
        %v1835 = vsel %vm486, %v1803, 0.0
        %v1836 = vadd.f32 %v1834, %v1835
        %v1837 = vsel %vm486, %v1804, 0.0
        %v1838 = vadd.f32 %v1836, %v1837
        %v1839 = vsel %vm486, %v1805, 0.0
        %v1840 = vadd.f32 %v1838, %v1839
        %v1841 = vrot.slane %v1840, 4
        %v1842 = vadd.f32 %v1840, %v1841
        %v1843 = vrot.slane %v1842, 2
        %v1844 = vadd.f32 %v1842, %v1843
        %v1845 = vrot.slane %v1844, 1
        %v1846 = vadd.f32 %v1844, %v1845
        %v1847 = vsel %vm486, %v1806, 0.0
        %v1848 = vsel %vm486, %v1807, 0.0
        %v1849 = vadd.f32 %v1847, %v1848
        %v1850 = vsel %vm486, %v1808, 0.0
        %v1851 = vadd.f32 %v1849, %v1850
        %v1852 = vsel %vm486, %v1809, 0.0
        %v1853 = vadd.f32 %v1851, %v1852
        %v1854 = vrot.slane %v1853, 4
        %v1855 = vadd.f32 %v1853, %v1854
        %v1856 = vrot.slane %v1855, 2
        %v1857 = vadd.f32 %v1855, %v1856
        %v1858 = vrot.slane %v1857, 1
        %v1859 = vadd.f32 %v1857, %v1858
        %v1860 = vsel %vm486, %v1810, 0.0
        %v1861 = vsel %vm486, %v1811, 0.0
        %v1862 = vadd.f32 %v1860, %v1861
        %v1863 = vsel %vm486, %v1812, 0.0
        %v1864 = vadd.f32 %v1862, %v1863
        %v1865 = vsel %vm486, %v1813, 0.0
        %v1866 = vadd.f32 %v1864, %v1865
        %v1867 = vrot.slane %v1866, 4
        %v1868 = vadd.f32 %v1866, %v1867
        %v1869 = vrot.slane %v1868, 2
        %v1870 = vadd.f32 %v1868, %v1869
        %v1871 = vrot.slane %v1870, 1
        %v1872 = vadd.f32 %v1870, %v1871
        %v1873 = vsel %vm486, %v1814, 0.0
        %v1874 = vsel %vm486, %v1815, 0.0
        %v1875 = vadd.f32 %v1873, %v1874
        %v1876 = vsel %vm486, %v1816, 0.0
        %v1877 = vadd.f32 %v1875, %v1876
        %v1878 = vsel %vm486, %v1817, 0.0
        %v1879 = vadd.f32 %v1877, %v1878
        %v1880 = vrot.slane %v1879, 4
        %v1881 = vadd.f32 %v1879, %v1880
        %v1882 = vrot.slane %v1881, 2
        %v1883 = vadd.f32 %v1881, %v1882
        %v1884 = vrot.slane %v1883, 1
        %v1885 = vadd.f32 %v1883, %v1884
        %v1886 = vsel %vm486, %v1818, 0.0
        %v1887 = vsel %vm486, %v1819, 0.0
        %v1888 = vadd.f32 %v1886, %v1887
        %v1889 = vsel %vm486, %v1820, 0.0
        %v1890 = vadd.f32 %v1888, %v1889
        %v1891 = vsel %vm486, %v1821, 0.0
        %v1892 = vadd.f32 %v1890, %v1891
        %v1893 = vrot.slane %v1892, 4
        %v1894 = vadd.f32 %v1892, %v1893
        %v1895 = vrot.slane %v1894, 2
        %v1896 = vadd.f32 %v1894, %v1895
        %v1897 = vrot.slane %v1896, 1
        %v1898 = vadd.f32 %v1896, %v1897
        %v1899 = vsel %vm486, %v1822, 0.0
        %v1900 = vsel %vm486, %v1823, 0.0
        %v1901 = vadd.f32 %v1899, %v1900
        %v1902 = vsel %vm486, %v1824, 0.0
        %v1903 = vadd.f32 %v1901, %v1902
        %v1904 = vsel %vm486, %v1825, 0.0
        %v1905 = vadd.f32 %v1903, %v1904
        %v1906 = vrot.slane %v1905, 4
        %v1907 = vadd.f32 %v1905, %v1906
        %v1908 = vrot.slane %v1907, 2
        %v1909 = vadd.f32 %v1907, %v1908
        %v1910 = vrot.slane %v1909, 1
        %v1911 = vadd.f32 %v1909, %v1910
        %v1912 = vsel %vm486, %v1826, 0.0
        %v1913 = vsel %vm486, %v1827, 0.0
        %v1914 = vadd.f32 %v1912, %v1913
        %v1915 = vsel %vm486, %v1828, 0.0
        %v1916 = vadd.f32 %v1914, %v1915
        %v1917 = vsel %vm486, %v1829, 0.0
        %v1918 = vadd.f32 %v1916, %v1917
        %v1919 = vrot.slane %v1918, 4
        %v1920 = vadd.f32 %v1918, %v1919
        %v1921 = vrot.slane %v1920, 2
        %v1922 = vadd.f32 %v1920, %v1921
        %v1923 = vrot.slane %v1922, 1
        %v1924 = vadd.f32 %v1922, %v1923
        %v1925 = vsel %vm486, %v1830, 0.0
        %v1926 = vsel %vm486, %v1831, 0.0
        %v1927 = vadd.f32 %v1925, %v1926
        %v1928 = vsel %vm486, %v1832, 0.0
        %v1929 = vadd.f32 %v1927, %v1928
        %v1930 = vsel %vm486, %v1833, 0.0
        %v1931 = vadd.f32 %v1929, %v1930
        %v1932 = vrot.slane %v1931, 4
        %v1933 = vadd.f32 %v1931, %v1932
        %v1934 = vrot.slane %v1933, 2
        %v1935 = vadd.f32 %v1933, %v1934
        %v1936 = vrot.slane %v1935, 1
        %v1937 = vadd.f32 %v1935, %v1936
        %v1938 = vmul.f32 %v1754, %v1754
        %v1939 = vmul.f32 %v1755, %v1755
        %v1940 = vmul.f32 %v1756, %v1756
        %v1941 = vmul.f32 %v1757, %v1757
        %v1942 = vmul.f32 %v1758, %v1758
        %v1943 = vmul.f32 %v1759, %v1759
        %v1944 = vmul.f32 %v1760, %v1760
        %v1945 = vmul.f32 %v1761, %v1761
        %v1946 = vmul.f32 %v1762, %v1762
        %v1947 = vmul.f32 %v1763, %v1763
        %v1948 = vmul.f32 %v1764, %v1764
        %v1949 = vmul.f32 %v1765, %v1765
        %v1950 = vmul.f32 %v1766, %v1766
        %v1951 = vmul.f32 %v1767, %v1767
        %v1952 = vmul.f32 %v1768, %v1768
        %v1953 = vmul.f32 %v1769, %v1769
        %v1954 = vmul.f32 %v1770, %v1770
        %v1955 = vmul.f32 %v1771, %v1771
        %v1956 = vmul.f32 %v1772, %v1772
        %v1957 = vmul.f32 %v1773, %v1773
        %v1958 = vmul.f32 %v1774, %v1774
        %v1959 = vmul.f32 %v1775, %v1775
        %v1960 = vmul.f32 %v1776, %v1776
        %v1961 = vmul.f32 %v1777, %v1777
        %v1962 = vmul.f32 %v1778, %v1778
        %v1963 = vmul.f32 %v1779, %v1779
        %v1964 = vmul.f32 %v1780, %v1780
        %v1965 = vmul.f32 %v1781, %v1781
        %v1966 = vmul.f32 %v1782, %v1782
        %v1967 = vmul.f32 %v1783, %v1783
        %v1968 = vmul.f32 %v1784, %v1784
        %v1969 = vmul.f32 %v1785, %v1785
        %v1970 = vsub.f32 1.0, %v1938
        %v1971 = vsub.f32 1.0, %v1939
        %v1972 = vsub.f32 1.0, %v1940
        %v1973 = vsub.f32 1.0, %v1941
        %v1974 = vsub.f32 1.0, %v1942
        %v1975 = vsub.f32 1.0, %v1943
        %v1976 = vsub.f32 1.0, %v1944
        %v1977 = vsub.f32 1.0, %v1945
        %v1978 = vsub.f32 1.0, %v1946
        %v1979 = vsub.f32 1.0, %v1947
        %v1980 = vsub.f32 1.0, %v1948
        %v1981 = vsub.f32 1.0, %v1949
        %v1982 = vsub.f32 1.0, %v1950
        %v1983 = vsub.f32 1.0, %v1951
        %v1984 = vsub.f32 1.0, %v1952
        %v1985 = vsub.f32 1.0, %v1953
        %v1986 = vsub.f32 1.0, %v1954
        %v1987 = vsub.f32 1.0, %v1955
        %v1988 = vsub.f32 1.0, %v1956
        %v1989 = vsub.f32 1.0, %v1957
        %v1990 = vsub.f32 1.0, %v1958
        %v1991 = vsub.f32 1.0, %v1959
        %v1992 = vsub.f32 1.0, %v1960
        %v1993 = vsub.f32 1.0, %v1961
        %v1994 = vsub.f32 1.0, %v1962
        %v1995 = vsub.f32 1.0, %v1963
        %v1996 = vsub.f32 1.0, %v1964
        %v1997 = vsub.f32 1.0, %v1965
        %v1998 = vsub.f32 1.0, %v1966
        %v1999 = vsub.f32 1.0, %v1967
        %v2000 = vsub.f32 1.0, %v1968
        %v2001 = vsub.f32 1.0, %v1969
        %v2002 = vmul.f32 %v1970, %v1397
        %v2003 = vmul.f32 %v1971, %v1400
        %v2004 = vmul.f32 %v1972, %v1405
        %v2005 = vmul.f32 %v1973, %v1408
        %v2006 = vmul.f32 %v1974, %v1446
        %v2007 = vmul.f32 %v1975, %v1449
        %v2008 = vmul.f32 %v1976, %v1454
        %v2009 = vmul.f32 %v1977, %v1457
        %v2010 = vmul.f32 %v1978, %v1495
        %v2011 = vmul.f32 %v1979, %v1498
        %v2012 = vmul.f32 %v1980, %v1503
        %v2013 = vmul.f32 %v1981, %v1506
        %v2014 = vmul.f32 %v1982, %v1544
        %v2015 = vmul.f32 %v1983, %v1547
        %v2016 = vmul.f32 %v1984, %v1552
        %v2017 = vmul.f32 %v1985, %v1555
        %v2018 = vmul.f32 %v1986, %v1593
        %v2019 = vmul.f32 %v1987, %v1596
        %v2020 = vmul.f32 %v1988, %v1601
        %v2021 = vmul.f32 %v1989, %v1604
        %v2022 = vmul.f32 %v1990, %v1642
        %v2023 = vmul.f32 %v1991, %v1645
        %v2024 = vmul.f32 %v1992, %v1650
        %v2025 = vmul.f32 %v1993, %v1653
        %v2026 = vmul.f32 %v1994, %v1691
        %v2027 = vmul.f32 %v1995, %v1694
        %v2028 = vmul.f32 %v1996, %v1699
        %v2029 = vmul.f32 %v1997, %v1702
        %v2030 = vmul.f32 %v1998, %v1740
        %v2031 = vmul.f32 %v1999, %v1743
        %v2032 = vmul.f32 %v2000, %v1748
        %v2033 = vmul.f32 %v2001, %v1751
        %v2034 = vmul.f32 %v2002, %v1788
        %v2035 = vmul.f32 %v2003, %v1792
        %v2036 = vmul.f32 %v2004, %v1796
        %v2037 = vmul.f32 %v2005, %v1800
        %v2038 = vmul.f32 %v2006, %v1788
        %v2039 = vmul.f32 %v2007, %v1792
        %v2040 = vmul.f32 %v2008, %v1796
        %v2041 = vmul.f32 %v2009, %v1800
        %v2042 = vmul.f32 %v2010, %v1788
        %v2043 = vmul.f32 %v2011, %v1792
        %v2044 = vmul.f32 %v2012, %v1796
        %v2045 = vmul.f32 %v2013, %v1800
        %v2046 = vmul.f32 %v2014, %v1788
        %v2047 = vmul.f32 %v2015, %v1792
        %v2048 = vmul.f32 %v2016, %v1796
        %v2049 = vmul.f32 %v2017, %v1800
        %v2050 = vmul.f32 %v2018, %v1788
        %v2051 = vmul.f32 %v2019, %v1792
        %v2052 = vmul.f32 %v2020, %v1796
        %v2053 = vmul.f32 %v2021, %v1800
        %v2054 = vmul.f32 %v2022, %v1788
        %v2055 = vmul.f32 %v2023, %v1792
        %v2056 = vmul.f32 %v2024, %v1796
        %v2057 = vmul.f32 %v2025, %v1800
        %v2058 = vmul.f32 %v2026, %v1788
        %v2059 = vmul.f32 %v2027, %v1792
        %v2060 = vmul.f32 %v2028, %v1796
        %v2061 = vmul.f32 %v2029, %v1800
        %v2062 = vmul.f32 %v2030, %v1788
        %v2063 = vmul.f32 %v2031, %v1792
        %v2064 = vmul.f32 %v2032, %v1796
        %v2065 = vmul.f32 %v2033, %v1800
        %v2066 = vsel %vm486, %v2034, 0.0
        %v2067 = vsel %vm486, %v2035, 0.0
        %v2068 = vadd.f32 %v2066, %v2067
        %v2069 = vsel %vm486, %v2036, 0.0
        %v2070 = vadd.f32 %v2068, %v2069
        %v2071 = vsel %vm486, %v2037, 0.0
        %v2072 = vadd.f32 %v2070, %v2071
        %v2073 = vrot.slane %v2072, 4
        %v2074 = vadd.f32 %v2072, %v2073
        %v2075 = vrot.slane %v2074, 2
        %v2076 = vadd.f32 %v2074, %v2075
        %v2077 = vrot.slane %v2076, 1
        %v2078 = vadd.f32 %v2076, %v2077
        %v2079 = vsel %vm486, %v2038, 0.0
        %v2080 = vsel %vm486, %v2039, 0.0
        %v2081 = vadd.f32 %v2079, %v2080
        %v2082 = vsel %vm486, %v2040, 0.0
        %v2083 = vadd.f32 %v2081, %v2082
        %v2084 = vsel %vm486, %v2041, 0.0
        %v2085 = vadd.f32 %v2083, %v2084
        %v2086 = vrot.slane %v2085, 4
        %v2087 = vadd.f32 %v2085, %v2086
        %v2088 = vrot.slane %v2087, 2
        %v2089 = vadd.f32 %v2087, %v2088
        %v2090 = vrot.slane %v2089, 1
        %v2091 = vadd.f32 %v2089, %v2090
        %v2092 = vsel %vm486, %v2042, 0.0
        %v2093 = vsel %vm486, %v2043, 0.0
        %v2094 = vadd.f32 %v2092, %v2093
        %v2095 = vsel %vm486, %v2044, 0.0
        %v2096 = vadd.f32 %v2094, %v2095
        %v2097 = vsel %vm486, %v2045, 0.0
        %v2098 = vadd.f32 %v2096, %v2097
        %v2099 = vrot.slane %v2098, 4
        %v2100 = vadd.f32 %v2098, %v2099
        %v2101 = vrot.slane %v2100, 2
        %v2102 = vadd.f32 %v2100, %v2101
        %v2103 = vrot.slane %v2102, 1
        %v2104 = vadd.f32 %v2102, %v2103
        %v2105 = vsel %vm486, %v2046, 0.0
        %v2106 = vsel %vm486, %v2047, 0.0
        %v2107 = vadd.f32 %v2105, %v2106
        %v2108 = vsel %vm486, %v2048, 0.0
        %v2109 = vadd.f32 %v2107, %v2108
        %v2110 = vsel %vm486, %v2049, 0.0
        %v2111 = vadd.f32 %v2109, %v2110
        %v2112 = vrot.slane %v2111, 4
        %v2113 = vadd.f32 %v2111, %v2112
        %v2114 = vrot.slane %v2113, 2
        %v2115 = vadd.f32 %v2113, %v2114
        %v2116 = vrot.slane %v2115, 1
        %v2117 = vadd.f32 %v2115, %v2116
        %v2118 = vsel %vm486, %v2050, 0.0
        %v2119 = vsel %vm486, %v2051, 0.0
        %v2120 = vadd.f32 %v2118, %v2119
        %v2121 = vsel %vm486, %v2052, 0.0
        %v2122 = vadd.f32 %v2120, %v2121
        %v2123 = vsel %vm486, %v2053, 0.0
        %v2124 = vadd.f32 %v2122, %v2123
        %v2125 = vrot.slane %v2124, 4
        %v2126 = vadd.f32 %v2124, %v2125
        %v2127 = vrot.slane %v2126, 2
        %v2128 = vadd.f32 %v2126, %v2127
        %v2129 = vrot.slane %v2128, 1
        %v2130 = vadd.f32 %v2128, %v2129
        %v2131 = vsel %vm486, %v2054, 0.0
        %v2132 = vsel %vm486, %v2055, 0.0
        %v2133 = vadd.f32 %v2131, %v2132
        %v2134 = vsel %vm486, %v2056, 0.0
        %v2135 = vadd.f32 %v2133, %v2134
        %v2136 = vsel %vm486, %v2057, 0.0
        %v2137 = vadd.f32 %v2135, %v2136
        %v2138 = vrot.slane %v2137, 4
        %v2139 = vadd.f32 %v2137, %v2138
        %v2140 = vrot.slane %v2139, 2
        %v2141 = vadd.f32 %v2139, %v2140
        %v2142 = vrot.slane %v2141, 1
        %v2143 = vadd.f32 %v2141, %v2142
        %v2144 = vsel %vm486, %v2058, 0.0
        %v2145 = vsel %vm486, %v2059, 0.0
        %v2146 = vadd.f32 %v2144, %v2145
        %v2147 = vsel %vm486, %v2060, 0.0
        %v2148 = vadd.f32 %v2146, %v2147
        %v2149 = vsel %vm486, %v2061, 0.0
        %v2150 = vadd.f32 %v2148, %v2149
        %v2151 = vrot.slane %v2150, 4
        %v2152 = vadd.f32 %v2150, %v2151
        %v2153 = vrot.slane %v2152, 2
        %v2154 = vadd.f32 %v2152, %v2153
        %v2155 = vrot.slane %v2154, 1
        %v2156 = vadd.f32 %v2154, %v2155
        %v2157 = vsel %vm486, %v2062, 0.0
        %v2158 = vsel %vm486, %v2063, 0.0
        %v2159 = vadd.f32 %v2157, %v2158
        %v2160 = vsel %vm486, %v2064, 0.0
        %v2161 = vadd.f32 %v2159, %v2160
        %v2162 = vsel %vm486, %v2065, 0.0
        %v2163 = vadd.f32 %v2161, %v2162
        %v2164 = vrot.slane %v2163, 4
        %v2165 = vadd.f32 %v2163, %v2164
        %v2166 = vrot.slane %v2165, 2
        %v2167 = vadd.f32 %v2165, %v2166
        %v2168 = vrot.slane %v2167, 1
        %v2169 = vadd.f32 %v2167, %v2168
        %v2170 = vmul.f32 %v426, 0.62831855
        %v2171 = vand.u32 2147483647, %v2170
        %vm2172 = vcmp.le.f32.partialorder %v2171, 0.7853982
        %vm2173 = vcmp.lt.s32.totalorder %v2170, 0
        %v2174 = vand.u32 %v2170, 2139095040
        %v2175 = vshrl.u32 %v2174, 23
        %v2176 = vsub.s32 %v2175, 127
        %v2177 = vand.u32 2147483647, %v2170
        %v2178 = vand.u32 %v2177, 8388607
        %v2179 = vor.u32 %v2178, 8388608
        %v2180 = vsub.s32 0, %v2179
        %v2181 = vadd.s32 %v2176, 1
        %vm2182 = vcmp.gt.s32.totalorder %v2181, 0
        %v2183 = vsel %vm2182, %v2181, 0
        %v2184 = vshrl.u32 %v2183, 5
        %v2185 = vand.u32 %v2183, 31
        %v2186 = vsub.s32 32, %v2185
        %v2187 = vshrl.u32 683565275, %v2186
        %v2188 = vshll.u32 683565275, %v2185
        %v2189 = vshrl.u32 2475754826, %v2186
        %v2190 = vor.u32 %v2188, %v2189
        %v2191 = vshll.u32 2475754826, %v2185
        %v2192 = vshrl.u32 2131351028, %v2186
        %v2193 = vor.u32 %v2191, %v2192
        %v2194 = vshll.u32 2131351028, %v2185
        %v2195 = vshrl.u32 2102212464, %v2186
        %v2196 = vor.u32 %v2194, %v2195
        %v2197 = vshll.u32 2102212464, %v2185
        %v2198 = vshrl.u32 920167782, %v2186
        %v2199 = vor.u32 %v2197, %v2198
        %v2200 = vshll.u32 920167782, %v2185
        %v2201 = vshrl.u32 1326507024, %v2186
        %v2202 = vor.u32 %v2200, %v2201
        %vm2203 = vcmp.lt.s32.totalorder %v2184, 1
        %vm2204 = vcmp.lt.s32.totalorder %v2184, 2
        %vm2205 = vcmp.lt.s32.totalorder %v2184, 3
        %vm2206 = vcmp.lt.s32.totalorder %v2184, 4
        %v2207 = vsel %vm2203, %v2187, %v2190
        %v2208 = vsel %vm2206, %v2196, 2102212464
        %v2209 = vsel %vm2205, %v2193, %v2208
        %v2210 = vsel %vm2204, %v2207, %v2209
        %v2211 = vsel %vm2203, %v2190, %v2193
        %v2212 = vsel %vm2206, %v2199, 920167782
        %v2213 = vsel %vm2205, %v2196, %v2212
        %v2214 = vsel %vm2204, %v2211, %v2213
        %v2215 = vsel %vm2203, %v2193, %v2196
        %v2216 = vsel %vm2206, %v2202, 1326507024
        %v2217 = vsel %vm2205, %v2199, %v2216
        %v2218 = vsel %vm2204, %v2215, %v2217
        %v2219 = vshll.u32 %v2179, 8
        %v2220 = vmul.u32.u64.compose %v2219, %v2218
        %v2221 = vextract.low.u32 %v2220
        %v2222 = vextract.high.u32 %v2220
        %v2223 = vmul.u32.u64.compose %v2219, %v2214
        %v2224 = vextract.low.u32 %v2223
        %v2225 = vextract.high.u32 %v2223
        %v2226 = vmul.u32 %v2219, %v2210
        %v2227 = vadd.s32 %v2222, %v2224
        %vm2228 = vc.u32 %v2222, %v2224
        %v2229 = vadd.s32 %v2225, 1
        %v2230 = vsel %vm2228, %v2229, %v2225
        %v2231 = vadd.s32 %v2226, %v2230
        %v2232 = vadd.s32 %v2231, 536870912
        %v2233 = vshrl.u32 %v2232, 30
        %v2234 = vshll.u32 %v2233, 30
        %v2235 = vsub.s32 %v2231, %v2234
        %vm2236 = vcmp.lt.s32.totalorder %v2235, 0
        %v2237 = vsub.s32 0, %v2235
        %v2238 = vsel %vm2236, %v2237, %v2235
        %v2239 = vclz %v2238
        %v2240 = vsub.s32 %v2239, 2
        %vm2241 = vcmp.gt.s32.totalorder 0, %v2240
        %v2242 = vsel %vm2241, 0, %v2240
        %v2243 = vsub.s32 32, %v2242
        %v2244 = vshll.u32 %v2235, %v2242
        %v2245 = vshrl.u32 %v2227, %v2243
        %v2246 = vor.u32 %v2244, %v2245
        %v2247 = vsub.s32 4294967266, %v2242
        %v2248 = vadd.s32 %v2247, 127
        %v2249 = vshll.u32 %v2248, 23
        %v2250 = vor.u32 4788187, %v2249
        %v2251 = vand.u32 2147483647, %v2250
        %v2253 = vcvt.s32.f32 %v2246
        %v2254 = vmul.f32 %v2253, %v2251
        %v2255 = vxor.u32 %v2254, 2147483648
        %v2256 = vsel %vm2173, %v2255, %v2254
        %v2257 = vsub.s32 4, %v2233
        %v2258 = vsel %vm2173, %v2257, %v2233
        %v2259 = vsel %vm2172, %v2170, %v2256
        %v2260 = vsel %vm2172, 0, %v2258
        %v2261 = vcosq.f32.pop %v2259
        %v2262 = vsinq.f32.pop %v2259
        %vm2263 = vweird.f32 %v2170
        %v2264 = vand.u32 %v2260, 3
        %vm2265 = vcmp.lt.s32.totalorder %v2264, 2
        %vm2266 = vcmp.eq.s32.totalorder %v2264, 0
        %v2267 = vxor.u32 %v2262, 2147483648
        %v2268 = vsel %vm2266, %v2261, %v2267
        %vm2269 = vcmp.eq.s32.totalorder %v2264, 2
        %v2270 = vxor.u32 %v2261, 2147483648
        %v2271 = vsel %vm2269, %v2270, %v2262
        %v2272 = vsel %vm2265, %v2268, %v2271
        %v2273 = vsel %vm2263, nan, %v2272
        %v2274 = vadd.f32 %v2273, 1.0
        %v2275 = vmul.f32 %v2274, 0.5
        %v2276 = vand.u32 2147483647, %v2170
        %vm2277 = vcmp.le.f32.partialorder %v2276, 0.7853982
        %vm2278 = vcmp.lt.s32.totalorder %v2170, 0
        %v2279 = vand.u32 %v2170, 2139095040
        %v2280 = vshrl.u32 %v2279, 23
        %v2281 = vsub.s32 %v2280, 127
        %v2282 = vand.u32 2147483647, %v2170
        %v2283 = vand.u32 %v2282, 8388607
        %v2284 = vor.u32 %v2283, 8388608
        %v2285 = vsub.s32 0, %v2284
        %v2286 = vadd.s32 %v2281, 1
        %vm2287 = vcmp.gt.s32.totalorder %v2286, 0
        %v2288 = vsel %vm2287, %v2286, 0
        %v2289 = vshrl.u32 %v2288, 5
        %v2290 = vand.u32 %v2288, 31
        %v2291 = vsub.s32 32, %v2290
        %v2292 = vshrl.u32 683565275, %v2291
        %v2293 = vshll.u32 683565275, %v2290
        %v2294 = vshrl.u32 2475754826, %v2291
        %v2295 = vor.u32 %v2293, %v2294
        %v2296 = vshll.u32 2475754826, %v2290
        %v2297 = vshrl.u32 2131351028, %v2291
        %v2298 = vor.u32 %v2296, %v2297
        %v2299 = vshll.u32 2131351028, %v2290
        %v2300 = vshrl.u32 2102212464, %v2291
        %v2301 = vor.u32 %v2299, %v2300
        %v2302 = vshll.u32 2102212464, %v2290
        %v2303 = vshrl.u32 920167782, %v2291
        %v2304 = vor.u32 %v2302, %v2303
        %v2305 = vshll.u32 920167782, %v2290
        %v2306 = vshrl.u32 1326507024, %v2291
        %v2307 = vor.u32 %v2305, %v2306
        %vm2308 = vcmp.lt.s32.totalorder %v2289, 1
        %vm2309 = vcmp.lt.s32.totalorder %v2289, 2
        %vm2310 = vcmp.lt.s32.totalorder %v2289, 3
        %vm2311 = vcmp.lt.s32.totalorder %v2289, 4
        %v2312 = vsel %vm2308, %v2292, %v2295
        %v2313 = vsel %vm2311, %v2301, 2102212464
        %v2314 = vsel %vm2310, %v2298, %v2313
        %v2315 = vsel %vm2309, %v2312, %v2314
        %v2316 = vsel %vm2308, %v2295, %v2298
        %v2317 = vsel %vm2311, %v2304, 920167782
        %v2318 = vsel %vm2310, %v2301, %v2317
        %v2319 = vsel %vm2309, %v2316, %v2318
        %v2320 = vsel %vm2308, %v2298, %v2301
        %v2321 = vsel %vm2311, %v2307, 1326507024
        %v2322 = vsel %vm2310, %v2304, %v2321
        %v2323 = vsel %vm2309, %v2320, %v2322
        %v2324 = vshll.u32 %v2284, 8
        %v2325 = vmul.u32.u64.compose %v2324, %v2323
        %v2326 = vextract.low.u32 %v2325
        %v2327 = vextract.high.u32 %v2325
        %v2328 = vmul.u32.u64.compose %v2324, %v2319
        %v2329 = vextract.low.u32 %v2328
        %v2330 = vextract.high.u32 %v2328
        %v2331 = vmul.u32 %v2324, %v2315
        %v2332 = vadd.s32 %v2327, %v2329
        %vm2333 = vc.u32 %v2327, %v2329
        %v2334 = vadd.s32 %v2330, 1
        %v2335 = vsel %vm2333, %v2334, %v2330
        %v2336 = vadd.s32 %v2331, %v2335
        %v2337 = vadd.s32 %v2336, 536870912
        %v2338 = vshrl.u32 %v2337, 30
        %v2339 = vshll.u32 %v2338, 30
        %v2340 = vsub.s32 %v2336, %v2339
        %vm2341 = vcmp.lt.s32.totalorder %v2340, 0
        %v2342 = vsub.s32 0, %v2340
        %v2343 = vsel %vm2341, %v2342, %v2340
        %v2344 = vclz %v2343
        %v2345 = vsub.s32 %v2344, 2
        %vm2346 = vcmp.gt.s32.totalorder 0, %v2345
        %v2347 = vsel %vm2346, 0, %v2345
        %v2348 = vsub.s32 32, %v2347
        %v2349 = vshll.u32 %v2340, %v2347
        %v2350 = vshrl.u32 %v2332, %v2348
        %v2351 = vor.u32 %v2349, %v2350
        %v2352 = vsub.s32 4294967266, %v2347
        %v2353 = vadd.s32 %v2352, 127
        %v2354 = vshll.u32 %v2353, 23
        %v2355 = vor.u32 4788187, %v2354
        %v2356 = vand.u32 2147483647, %v2355
        %v2358 = vcvt.s32.f32 %v2351
        %v2359 = vmul.f32 %v2358, %v2356
        %v2360 = vxor.u32 %v2359, 2147483648
        %v2361 = vsel %vm2278, %v2360, %v2359
        %v2362 = vsub.s32 4, %v2338
        %v2363 = vsel %vm2278, %v2362, %v2338
        %v2364 = vsel %vm2277, %v2170, %v2361
        %v2365 = vsel %vm2277, 0, %v2363
        %v2366 = vcosq.f32.pop %v2364
        %v2367 = vsinq.f32.pop %v2364
        %vm2368 = vweird.f32 %v2170
        %v2369 = vadd.s32 %v2365, 3
        %v2370 = vand.u32 %v2369, 3
        %vm2371 = vcmp.lt.s32.totalorder %v2370, 2
        %vm2372 = vcmp.eq.s32.totalorder %v2370, 0
        %v2373 = vxor.u32 %v2367, 2147483648
        %v2374 = vsel %vm2372, %v2366, %v2373
        %vm2375 = vcmp.eq.s32.totalorder %v2370, 2
        %v2376 = vxor.u32 %v2366, 2147483648
        %v2377 = vsel %vm2375, %v2376, %v2367
        %v2378 = vsel %vm2371, %v2374, %v2377
        %v2379 = vsel %vm2368, nan, %v2378
        %v2380 = vmul.f32 %v2379, -0.31415927
        %v2381 = vmul.f32 %v479, %v560
        %v2382 = vmul.f32 %v2381, %v2275
        %vm2391 = vcmask 1041409
        %v2392 = vsel %vm2391, %v1859, %v1846
        %vm2393 = vcmask 1042434
        %v2394 = vsel %vm2393, %v1872, %v2392
        %vm2395 = vcmask 1043459
        %v2396 = vsel %vm2395, %v1885, %v2394
        %vm2397 = vcmask 1044484
        %v2398 = vsel %vm2397, %v1898, %v2396
        %vm2399 = vcmask 1045509
        %v2400 = vsel %vm2399, %v1911, %v2398
        %vm2401 = vcmask 1046534
        %v2402 = vsel %vm2401, %v1924, %v2400
        %vm2403 = vcmask 1047559
        %v2404 = vsel %vm2403, %v1937, %v2402
        %v2406 = vmul.f32 %v2382, %v2404
        %v2407 = vmul.f32 %v2380, %v2404
        %v2416 = vsel %vm2391, %v2091, %v2078
        %v2417 = vsel %vm2393, %v2104, %v2416
        %v2418 = vsel %vm2395, %v2117, %v2417
        %v2419 = vsel %vm2397, %v2130, %v2418
        %v2420 = vsel %vm2399, %v2143, %v2419
        %v2421 = vsel %vm2401, %v2156, %v2420
        %v2422 = vsel %vm2403, %v2169, %v2421
        %v2424 = vmul.f32 %v2275, %v2422
        %v2425 = vadd.f32 %v2407, %v2424
        %v2426 = vmul.f32 %v2381, %v2425
        %v2427 = vrcp.pop %v426
        %v2428 = vmul.f32 %v2426, %v2427
        %v2429 = vld [vmem:[#allocation2] sm:$0xff]
        %v2431 = vsel %vm486, %v2428, 0
        %2433 = vmatprep.subr.mxu0 0.0
        %2434 = vmatpush1.msra.mxu0 0.0
        %2435 = vmatprep.subr.mxu0 0.0
        %2436 = vmatpush1.msra.mxu0 0.0
        %2437 = vmatprep.subr.mxu0 0.0
        %2438 = vmatpush1.msra.mxu0 0.0
        %2439 = vmatprep.subr.mxu0 0.0
        %2440 = vmatpush1.msra.mxu0 0.0
        %2441 = vmatprep.subr.mxu0 0.0
        %2442 = vmatpush1.msra.mxu0 0.0
        %2443 = vmatprep.subr.mxu0 0.0
        %2444 = vmatpush1.msra.mxu0 0.0
        %2445 = vmatprep.subr.mxu0 0.0
        %2446 = vmatpush1.msra.mxu0 0.0
        %2447 = vmatprep.subr.mxu0 0.0
        %2448 = vmatpush1.msra.mxu0 0.0
        %2449 = vmatprep.subr.mxu0 0.0
        %2450 = vmatpush1.msra.mxu0 0.0
        %2451 = vmatprep.subr.mxu0 0.0
        %2452 = vmatpush1.msra.mxu0 0.0
        %2453 = vmatprep.subr.mxu0 0.0
        %2454 = vmatpush1.msra.mxu0 0.0
        %2455 = vmatprep.subr.mxu0 0.0
        %2456 = vmatpush1.msra.mxu0 0.0
        %2457 = vmatprep.subr.mxu0 0.0
        %2458 = vmatpush1.msra.mxu0 0.0
        %2459 = vmatprep.subr.mxu0 0.0
        %2460 = vmatpush1.msra.mxu0 0.0
        %2461 = vmatprep.subr.mxu0 0.0
        %2462 = vmatpush1.msra.mxu0 %v261
        %2463 = vmatprep.subr.mxu0 0.0
        %2464 = vmatpush1.msra.mxu0 %v260
        %2465 = vmatprep.subr.mxu0 0.0
        %2466 = vmatpush2.msra.mxu0 0.0
        %2467 = vmatprep.subr.mxu0 0.0
        %2468 = vmatpush2.msra.mxu0 0.0
        %2469 = vmatprep.subr.mxu0 0.0
        %2470 = vmatpush2.msra.mxu0 0.0
        %2471 = vmatprep.subr.mxu0 0.0
        %2472 = vmatpush2.msra.mxu0 0.0
        %2473 = vmatprep.subr.mxu0 0.0
        %2474 = vmatpush2.msra.mxu0 0.0
        %2475 = vmatprep.subr.mxu0 0.0
        %2476 = vmatpush2.msra.mxu0 0.0
        %2477 = vmatprep.subr.mxu0 0.0
        %2478 = vmatpush2.msra.mxu0 0.0
        %2479 = vmatprep.subr.mxu0 0.0
        %2480 = vmatpush2.msra.mxu0 0.0
        %2481 = vmatprep.subr.mxu0 0.0
        %2482 = vmatpush2.msra.mxu0 0.0
        %2483 = vmatprep.subr.mxu0 0.0
        %2484 = vmatpush2.msra.mxu0 0.0
        %2485 = vmatprep.subr.mxu0 0.0
        %2486 = vmatpush2.msra.mxu0 0.0
        %2487 = vmatprep.subr.mxu0 0.0
        %2488 = vmatpush2.msra.mxu0 0.0
        %2489 = vmatprep.subr.mxu0 0.0
        %2490 = vmatpush2.msra.mxu0 0.0
        %2491 = vmatprep.subr.mxu0 0.0
        %2492 = vmatpush2.msra.mxu0 0.0
        %2493 = vmatprep.subr.mxu0 0.0
        %2494 = vmatpush2.msra.mxu0 0.0
        %2495 = vmatprep.subr.mxu0 0.0
        %2496 = vmatpush2.msra.mxu0 0.0
        %2497 = vmatprep.mubr.f32.mxu0 0.0
        %2498 = vmatmul.mubr.f32.gmra.mxu0 %v2431
        %v2499 = vpop.f32.mrf.mxu0
        %v2500 = vadd.f32 0.0, %v2499
        %v2501 = vpop.f32.mrf.mxu0
        %2502 = vdwg.mxu0
        %v2503 = vadd.f32 %v2429, %v2500
        %2504 = vst [vmem:[#allocation2] sm:$0xff] %v2503
        %v2505 = vld [vmem:[#allocation2] sm:$0xff]
        %v2506 = vsel %vm486, %v2406, 0.0
        %2507 = vadd.xlane.f32.xlu0 %v2506
        %v2508 = vpop.xlane.xlu0 %2507
        %v2509 = vadd.f32 %v2505, %v2508
        %vm2510 = vcmask 48168
        %2511 = vst.msk [vmem:[#allocation2] sm:$0xff] %vm2510, %v2509
      $region44: #{mattersim_forward.1} parent=35 // pred_fallthru
        _
      // Predicated region
      $region45: #{mattersim_forward.1} parent=35 // pred_check
        %p2512 = pneg %p244
      $region46: #{mattersim_forward.1} parent=35 // pred_check_branch
        %2514 = sbr.rel (%p2512) target = $region48
      $region47: #{mattersim_forward.1} parent=35 // pred_region
        %v2515 = vld [vmem:[#allocation2] sm:$0xff]
        %2517 = vset.pattern.permute.xlu0 4
        %2518 = vperm.xlu0 %2517, %v2515
        %v2519 = vpop.permute.xlu0 %2518
        %v2521 = vmul.f32 %v2519, %v249
        %v2522 = vsub.f32 %v2515, %v2521
        %v2523 = vmul.f32 %v2515, 0.5
        %v2524 = vlaneseq
        %v2525 = vshrl.u32 %v2524, 7
        %v2526 = vsub.s32 0, %v2525
        %v2527 = vrot.slane %v249, %v2526
        %2529 = vbcast.lane.b32.xlu0 %v2527, 256
        %v2530 = vpop.permute.xlu0 %2529
        %v2531 = vlaneseq
        %v2532 = vshrl.u32 %v2531, 7
        %v2533 = vsub.s32 1, %v2532
        %v2534 = vrot.slane %v249, %v2533
        %2536 = vbcast.lane.b32.xlu0 %v2534, 256
        %v2537 = vpop.permute.xlu0 %2536
        %v2538 = vlaneseq
        %v2539 = vshrl.u32 %v2538, 7
        %v2540 = vsub.s32 2, %v2539
        %v2541 = vrot.slane %v249, %v2540
        %2543 = vbcast.lane.b32.xlu0 %v2541, 256
        %v2544 = vpop.permute.xlu0 %2543
        %v2545 = vlaneseq
        %v2546 = vshrl.u32 %v2545, 7
        %v2547 = vsub.s32 3, %v2546
        %v2548 = vrot.slane %v249, %v2547
        %2550 = vbcast.lane.b32.xlu0 %v2548, 256
        %v2551 = vpop.permute.xlu0 %2550
        %v2552 = vlaneseq
        %v2553 = vshrl.u32 %v2552, 7
        %v2554 = vsub.s32 4, %v2553
        %v2555 = vrot.slane %v249, %v2554
        %2557 = vbcast.lane.b32.xlu0 %v2555, 256
        %v2558 = vpop.permute.xlu0 %2557
        %v2559 = vlaneseq
        %v2560 = vshrl.u32 %v2559, 7
        %v2561 = vsub.s32 5, %v2560
        %v2562 = vrot.slane %v249, %v2561
        %2564 = vbcast.lane.b32.xlu0 %v2562, 256
        %v2565 = vpop.permute.xlu0 %2564
        %v2566 = vlaneseq
        %v2567 = vshrl.u32 %v2566, 7
        %v2568 = vsub.s32 6, %v2567
        %v2569 = vrot.slane %v249, %v2568
        %2571 = vbcast.lane.b32.xlu0 %v2569, 256
        %v2572 = vpop.permute.xlu0 %2571
        %v2573 = vlaneseq
        %v2574 = vshrl.u32 %v2573, 7
        %v2575 = vsub.s32 7, %v2574
        %v2576 = vrot.slane %v249, %v2575
        %2578 = vbcast.lane.b32.xlu0 %v2576, 256
        %v2579 = vpop.permute.xlu0 %2578
        %v2581 = vcombine.high %v2522, %v2522
        %v2583 = vunpack.c.l.s4 1966171168
        %v2584 = vunpack.c.0.s8 %v2583
        %v2585 = vlaneseq
        %v2586 = vshrl.u32 %v2585, 7
        %v2587 = vsub.s32 %v2584, %v2586
        %v2588 = vrot.slane %v2522, %v2587
        %v2590 = vunpack.c.l.s4 1966171168
        %v2591 = vunpack.c.0.s8 %v2590
        %v2592 = vlaneseq
        %v2593 = vshrl.u32 %v2592, 7
        %v2594 = vsub.s32 %v2591, %v2593
        %v2595 = vrot.slane %v2581, %v2594
        %v2596 = vcombine.high %v2588, %v2588
        %v2597 = vcombine.high %v2595, %v2595
        %v2599 = vunpack.c.l.s4 1966171168
        %v2600 = vunpack.c.0.s8 %v2599
        %v2601 = vlaneseq
        %v2602 = vshrl.u32 %v2601, 7
        %v2603 = vsub.s32 %v2600, %v2602
        %v2604 = vrot.slane %v2588, %v2603
        %v2606 = vunpack.c.l.s4 1966171168
        %v2607 = vunpack.c.0.s8 %v2606
        %v2608 = vlaneseq
        %v2609 = vshrl.u32 %v2608, 7
        %v2610 = vsub.s32 %v2607, %v2609
        %v2611 = vrot.slane %v2595, %v2610
        %v2613 = vunpack.c.l.s4 1966171168
        %v2614 = vunpack.c.0.s8 %v2613
        %v2615 = vlaneseq
        %v2616 = vshrl.u32 %v2615, 7
        %v2617 = vsub.s32 %v2614, %v2616
        %v2618 = vrot.slane %v2596, %v2617
        %v2620 = vunpack.c.l.s4 1966171168
        %v2621 = vunpack.c.0.s8 %v2620
        %v2622 = vlaneseq
        %v2623 = vshrl.u32 %v2622, 7
        %v2624 = vsub.s32 %v2621, %v2623
        %v2625 = vrot.slane %v2597, %v2624
        %v2626 = vcombine.high %v2604, %v2604
        %v2627 = vcombine.high %v2611, %v2611
        %v2628 = vcombine.high %v2618, %v2618
        %v2629 = vcombine.high %v2625, %v2625
        %v2630 = vlaneseq
        %v2631 = vshrl.u32 %v2630, 7
        %v2632 = vsub.s32 0, %v2631
        %v2633 = vrot.slane %v2604, %v2632
        %v2634 = vlaneseq
        %v2635 = vshrl.u32 %v2634, 7
        %v2636 = vsub.s32 0, %v2635
        %v2637 = vrot.slane %v2618, %v2636
        %v2638 = vlaneseq
        %v2639 = vshrl.u32 %v2638, 7
        %v2640 = vsub.s32 0, %v2639
        %v2641 = vrot.slane %v2626, %v2640
        %v2642 = vlaneseq
        %v2643 = vshrl.u32 %v2642, 7
        %v2644 = vsub.s32 0, %v2643
        %v2645 = vrot.slane %v2628, %v2644
        %v2646 = vlaneseq
        %v2647 = vshrl.u32 %v2646, 7
        %v2648 = vsub.s32 0, %v2647
        %v2649 = vrot.slane %v2611, %v2648
        %v2650 = vlaneseq
        %v2651 = vshrl.u32 %v2650, 7
        %v2652 = vsub.s32 0, %v2651
        %v2653 = vrot.slane %v2625, %v2652
        %v2654 = vlaneseq
        %v2655 = vshrl.u32 %v2654, 7
        %v2656 = vsub.s32 0, %v2655
        %v2657 = vrot.slane %v2627, %v2656
        %v2658 = vlaneseq
        %v2659 = vshrl.u32 %v2658, 7
        %v2660 = vsub.s32 0, %v2659
        %v2661 = vrot.slane %v2629, %v2660
        %v2670 = vmul.f32 %v2530, %v2633
        %v2671 = vmul.f32 %v2537, %v2637
        %v2672 = vmul.f32 %v2544, %v2641
        %v2673 = vmul.f32 %v2551, %v2645
        %v2674 = vmul.f32 %v2558, %v2649
        %v2675 = vmul.f32 %v2565, %v2653
        %v2676 = vmul.f32 %v2572, %v2657
        %v2677 = vmul.f32 %v2579, %v2661
        %v2678 = vcombine.low %v2670, %v2672
        %v2680 = vunpack.c.l.s4 1983009808
        %v2681 = vunpack.c.0.s8 %v2680
        %v2682 = vlaneseq
        %v2683 = vshrl.u32 %v2682, 7
        %v2684 = vsub.s32 %v2681, %v2683
        %v2685 = vrot.slane %v2678, %v2684
        %v2686 = vcombine.low %v2671, %v2673
        %v2688 = vunpack.c.l.s4 1983009808
        %v2689 = vunpack.c.0.s8 %v2688
        %v2690 = vlaneseq
        %v2691 = vshrl.u32 %v2690, 7
        %v2692 = vsub.s32 %v2689, %v2691
        %v2693 = vrot.slane %v2686, %v2692
        %v2694 = vcombine.low %v2674, %v2676
        %v2696 = vunpack.c.l.s4 1983009808
        %v2697 = vunpack.c.0.s8 %v2696
        %v2698 = vlaneseq
        %v2699 = vshrl.u32 %v2698, 7
        %v2700 = vsub.s32 %v2697, %v2699
        %v2701 = vrot.slane %v2694, %v2700
        %v2702 = vcombine.low %v2675, %v2677
        %v2704 = vunpack.c.l.s4 1983009808
        %v2705 = vunpack.c.0.s8 %v2704
        %v2706 = vlaneseq
        %v2707 = vshrl.u32 %v2706, 7
        %v2708 = vsub.s32 %v2705, %v2707
        %v2709 = vrot.slane %v2702, %v2708
        %v2710 = vcombine.low %v2685, %v2693
        %v2711 = vcombine.high %v2685, %v2693
        %v2713 = vunpack.c.l.s4 1934713408
        %v2714 = vunpack.c.0.s8 %v2713
        %v2715 = vlaneseq
        %v2716 = vshrl.u32 %v2715, 7
        %v2717 = vsub.s32 %v2714, %v2716
        %v2718 = vrot.slane %v2710, %v2717
        %v2720 = vunpack.c.l.s4 1934713408
        %v2721 = vunpack.c.0.s8 %v2720
        %v2722 = vlaneseq
        %v2723 = vshrl.u32 %v2722, 7
        %v2724 = vsub.s32 %v2721, %v2723
        %v2725 = vrot.slane %v2711, %v2724
        %v2726 = vcombine.low %v2701, %v2709
        %v2727 = vcombine.high %v2701, %v2709
        %v2729 = vunpack.c.l.s4 1934713408
        %v2730 = vunpack.c.0.s8 %v2729
        %v2731 = vlaneseq
        %v2732 = vshrl.u32 %v2731, 7
        %v2733 = vsub.s32 %v2730, %v2732
        %v2734 = vrot.slane %v2726, %v2733
        %v2736 = vunpack.c.l.s4 1934713408
        %v2737 = vunpack.c.0.s8 %v2736
        %v2738 = vlaneseq
        %v2739 = vshrl.u32 %v2738, 7
        %v2740 = vsub.s32 %v2737, %v2739
        %v2741 = vrot.slane %v2727, %v2740
        %v2742 = vcombine.low %v2718, %v2734
        %v2743 = vcombine.high %v2718, %v2734
        %v2744 = vcombine.low %v2725, %v2741
        %2746 = vrot.lane.b32.xlu0 %v2743, 3
        %v2747 = vpop.permute.xlu0 %2746
        %2750 = vrot.lane.b32.xlu0 %v2744, 6
        %v2751 = vpop.permute.xlu0 %2750
        %vm2753 = vcmask 23552
        %v2754 = vsel %vm2753, %v2742, %v2747
        %vm2755 = vcmask 48128
        %v2756 = vsel %vm2755, %v2754, %v2751
        %2758 = vrot.lane.b32.xlu0 %v2523, 126
        %v2759 = vpop.permute.xlu0 %2758
        %2762 = vrot.lane.b32.xlu0 %v2756, 4
        %v2763 = vpop.permute.xlu0 %2762
        %v2765 = vsel %vm2753, %v2522, %v2759
        %vm2766 = vcmask 31744
        %v2767 = vsel %vm2766, %v2765, %v2763
        %vm2768 = vcmask 105472
        %v2769 = vsel %vm2768, %v2767, 0.0
        %2770 = vst [vmem:[%s242] sm:$0xff] %v2769
      $region48: #{mattersim_forward.1} parent=35 // pred_fallthru
        _
      %p2771 = scmp.lt.s32.totalorder %s35, 1
      %s2772 = scalar_select %p2771, %s35, 1
      %s2773 = smul.addr %s2772, 8
      %s2774 = scalar_lea.vmem %s8, %s2773
      // Predicated region
      $region49: #{mattersim_forward.1} parent=35 // pred_check
        %p2775 = pneg %p155
      $region50: #{mattersim_forward.1} parent=35 // pred_check_branch
        %2777 = sbr.rel (%p2775) target = $region52
      $region51: #{mattersim_forward.1} parent=35 // pred_region
        _
      $region52: #{mattersim_forward.1} parent=35 // pred_fallthru
        _
    $region36: #{mattersim_forward.1} parent=5 // pred_fallthru
      _
    %p2778 = scmp.le.s32.totalorder 2, %s26
    // Predicated region
    $region53: #{mattersim_forward.1} parent=5 // pred_check
      %p2779 = pneg %p2778
    $region54: #{mattersim_forward.1} parent=5 // pred_check_branch
      %2781 = sbr.rel (%p2779) target = $region56
    $region55: #{mattersim_forward.1} parent=5 // pred_region
      %s2782 = ssub.s32 %s26, 2
      // Predicated region
      $region57: #{mattersim_forward.1} parent=55 // pred_check
        %p2783 = pneg %p161
      $region58: #{mattersim_forward.1} parent=55 // pred_check_branch
        %2785 = sbr.rel (%p2783) target = $region60
      $region59: #{mattersim_forward.1} parent=55 // pred_region
        %p2786 = scmp.lt.s32.totalorder %s37, 1
        %s2787 = scalar_select %p2786, %s37, 1
        %s2788 = smul.addr %s2787, 8
        %s2789 = scalar_lea.vmem %s8, %s2788
      $region60: #{mattersim_forward.1} parent=55 // pred_fallthru
        _
    $region56: #{mattersim_forward.1} parent=5 // pred_fallthru
      _
  $region6: #{mattersim_forward.1} parent=0 // loop_footer
    %s30 = sadd.s32 1, %s26
  $region7: #{mattersim_forward.1} parent=0 // loop_footer_branch
    %25 = sbr.rel target = $region3
  $region8: #{mattersim_forward.1} parent=0 // loop_exit
    _

</llo_original>
